<compile_context>
chip_gen: v6e
topology: v6e:2x2x1
jax: 0.10.0
libtpu: 0.0.40
codegen_flags: <defaults>
</compile_context>

<pallas_src>
import functools

import jax
import jax.numpy as jnp
from jax.experimental import pallas as pl
from jax.experimental.pallas import tpu as pltpu

LEAKY_SLOPE = 0.01  # nn.LeakyReLU() default
EPS = 1e-5          # LayerNorm eps in the module


def _round_up(x, m):
    return ((x + m - 1) // m) * m


def _cdiv(a, b):
    return (a + b - 1) // b


def _vmem_limit_bytes():
    """Generation-aware VMEM limit (v7x: 64 MiB physical, v5e/v6e: 128 MiB)."""
    try:
        cap = int(pltpu.get_tpu_info().vmem_capacity_bytes)
    except Exception:
        cap = 64 * 1024 * 1024  # conservative default (v7x-sized)
    return max(32 * 1024 * 1024, min(cap - 16 * 1024 * 1024, 100 * 1024 * 1024))


def _pick_pixel_tile(h, wp, n_batch, cout, out_itemsize, vmem_budget):
    """Pixel tile TP (multiple of 128) per grid step.

    Large enough to amortize the ~0.35us/step overhead, small enough that the f32 accumulator
    (Cout x TP) and the double-buffered output block stay comfortably in vregs/VMEM.  When
    N == 1 we force >= 2 tiles so v7x's two TensorCores both get work.
    """
    lout_img = _round_up(h * wp, 128)
    budget_tp = max(128, ((vmem_budget // (4 * cout * out_itemsize)) // 128) * 128)
    tp = min(lout_img, 1024, budget_tp)
    if n_batch == 1 and lout_img > 128:
        tp = min(tp, _round_up(_cdiv(h * wp, 2), 128))
    return max(tp, 128)


def _myblock_kernel(x_ref, w_ref, prm_ref, o_ref, *, K, Wp, TP, HALO, n_tiles):
    """One (image, pixel-tile) per grid step.

    x_ref   : (1, Cin, L_in)   zero-padded image, flattened padded spatial grid (VMEM-resident)
    w_ref   : (K*K, Cout, Cin) per-tap conv weights, tap = dy*K + dx
    prm_ref : (3, Cout, 1)     [conv bias, LN gamma, LN beta], f32
    o_ref   : (1, Cout, TP)    output pixel tile (flat padded-grid coordinates)
    """
    cout = w_ref.shape[1]

    if n_tiles == 1:
        start = 0  # fully static slicing (test path)
    else:
        start = pl.multiple_of(pl.program_id(1) * TP, 128)
    # One (aligned) windowed load per step; every tap is a static lane shift of this slab.
    xt = x_ref[0, :, pl.ds(start, TP + HALO)]                    # (Cin, TP + HALO)

    # --- Conv2d: K*K small MXU GEMMs accumulated in f32 ---
    acc = jnp.zeros((cout, TP), jnp.float32)
    for dy in range(K):
        for dx in range(K):
            shift = dy * Wp + dx
            xs = xt[:, shift:shift + TP]                         # (Cin, TP), static slice
            acc = acc + jnp.dot(w_ref[dy * K + dx], xs,
                                preferred_element_type=jnp.float32)

    bias = prm_ref[0]                                            # (Cout, 1) f32
    gamma = prm_ref[1]
    beta = prm_ref[2]
    acc = acc + bias                                             # lane broadcast

    # --- Per-pixel LayerNorm over the channel (sublane) axis, biased variance ---
    mean = jnp.mean(acc, axis=0, keepdims=True)                  # (1, TP)
    centered = acc - mean
    var = jnp.mean(centered * centered, axis=0, keepdims=True)
    y = centered * jax.lax.rsqrt(var + EPS)                      # rsqrt -> EUP slot
    y = y * gamma + beta

    # --- LeakyReLU (slope < 1  =>  max(y, slope*y)) ---
    y = jnp.maximum(y, LEAKY_SLOPE * y)

    o_ref[0] = y.astype(o_ref.dtype)


def myblock_forward(x_nchw, w, bias, g, b, *, large_filter=False, conv_dtype=jnp.bfloat16):
    """x_nchw: (N, Cin, H, W); w: (Cout, Cin, K, K) [torch OIHW]; bias/g/b: (Cout,)."""
    K = 5 if large_filter else 3
    pad = 2 if large_filter else 1
    N, Cin, H, W = x_nchw.shape
    Cout = w.shape[0]
    Hp, Wp = H + 2 * pad, W + 2 * pad
    cd = jnp.dtype(conv_dtype) if conv_dtype is not None else x_nchw.dtype

    vmem_limit = _vmem_limit_bytes()
    TP = _pick_pixel_tile(H, Wp, N, Cout, jnp.dtype(x_nchw.dtype).itemsize,
                          (vmem_limit * 3) // 4)
    n_tiles = _cdiv(H * Wp, TP)
    L_out = n_tiles * TP
    HALO = _round_up((K - 1) * (Wp + 1), 128)
    L_in = _round_up(max(L_out + HALO, Hp * Wp), 128)
    # TODO(synk): for huge images where Cin*L_in no longer fits VMEM, switch the input to
    # halo-banded blocks (manual make_async_copy) instead of keeping the whole image resident.

    # ---- wrapper-side plumbing: spatial zero-pad + flatten (no im2col, no transpose) ----
    x_pad = jnp.pad(x_nchw, ((0, 0), (0, 0), (pad, pad), (pad, pad)))
    xf = x_pad.reshape(N, Cin, Hp * Wp)
    xf = jnp.pad(xf, ((0, 0), (0, 0), (0, L_in - Hp * Wp))).astype(cd)

    # (Cout, Cin, K, K) -> per-tap (K*K, Cout, Cin), tap = dy*K + dx.
    w_taps = jnp.transpose(w, (2, 3, 0, 1)).reshape(K * K, Cout, Cin).astype(cd)

    # conv bias / LN gamma / LN beta merged into one VMEM-resident f32 block.
    prm = jnp.stack([bias, g, b], axis=0).reshape(3, Cout, 1).astype(jnp.float32)

    kernel = functools.partial(_myblock_kernel, K=K, Wp=Wp, TP=TP, HALO=HALO,
                               n_tiles=n_tiles)

    out_flat = pl.pallas_call(
        kernel,
        out_shape=jax.ShapeDtypeStruct((N, Cout, L_out), x_nchw.dtype),
        grid_spec=pltpu.PrefetchScalarGridSpec(
            num_scalar_prefetch=0,
            grid=(N, n_tiles),
            in_specs=[
                pl.BlockSpec((1, Cin, L_in), lambda n, t: (n, 0, 0)),       # resident per image
                pl.BlockSpec((K * K, Cout, Cin), lambda n, t: (0, 0, 0)),   # resident weights
                pl.BlockSpec((3, Cout, 1), lambda n, t: (0, 0, 0)),         # resident params
            ],
            out_specs=pl.BlockSpec((1, Cout, TP), lambda n, t: (n, 0, t)),
        ),
        compiler_params=pltpu.CompilerParams(
            dimension_semantics=("parallel", "parallel"),
            vmem_limit_bytes=vmem_limit,
        ),
    )(xf, w_taps, prm)

    # Valid outputs live at flat index y*Wp + x (y < H, x < W) of each image's padded grid.
    out = out_flat[:, :, :H * Wp].reshape(N, Cout, H, Wp)[:, :, :, :W]
    return out


def _reference(x_nchw, w, bias, g, b, *, large_filter=False):
    """Pure-JAX reference matching the PyTorch forward semantics (f32 throughout)."""
    pad = 2 if large_filter else 1
    y = jax.lax.conv_general_dilated(
        x_nchw.astype(jnp.float32), w.astype(jnp.float32),
        window_strides=(1, 1), padding=[(pad, pad), (pad, pad)],
        dimension_numbers=("NCHW", "OIHW", "NCHW"),
        precision=jax.lax.Precision.HIGHEST)
    y = y + bias.reshape(1, -1, 1, 1)
    mean = jnp.mean(y, axis=1, keepdims=True)
    var = jnp.mean((y - mean) ** 2, axis=1, keepdims=True)
    y = (y - mean) / jnp.sqrt(var + EPS) * g.reshape(1, -1, 1, 1) + b.reshape(1, -1, 1, 1)
    return jnp.where(y >= 0, y, LEAKY_SLOPE * y).astype(x_nchw.dtype)


if __name__ == "__main__":
    # Shapes consistent with the module: myBlock(dim=4, dim_out=8), input (2, 4, 16, 16).
    N, Cin, Cout, H, W = 2, 4, 8, 16, 16
    key = jax.random.PRNGKey(0)
    kx, kw3, kw5, kb, kg, kbb = jax.random.split(key, 6)

    x = jax.random.normal(kx, (N, Cin, H, W), dtype=jnp.float32)
    w3 = 0.1 * jax.random.normal(kw3, (Cout, Cin, 3, 3), dtype=jnp.float32)
    w5 = 0.1 * jax.random.normal(kw5, (Cout, Cin, 5, 5), dtype=jnp.float32)
    bias = 0.1 * jax.random.normal(kb, (Cout,), dtype=jnp.float32)
    g = 1.0 + 0.05 * jax.random.normal(kg, (Cout,), dtype=jnp.float32)
    b = 0.05 * jax.random.normal(kbb, (Cout,), dtype=jnp.float32)

    def _bf16_round(a):
        return a.astype(jnp.bfloat16).astype(jnp.float32)

    # --- default path: bf16 GEMM operands, f32 accumulation / LN (3x3 conv) ---
    out3 = jax.block_until_ready(myblock_forward(x, w3, bias, g, b, large_filter=False))
    assert out3.shape == (N, Cout, H, W), out3.shape
    ref3 = _reference(_bf16_round(x), _bf16_round(w3), bias, g, b, large_filter=False)
    err3 = float(jnp.max(jnp.abs(out3 - ref3)))
    assert jnp.allclose(out3, ref3, atol=3e-3, rtol=3e-3), err3

    # bf16-operand policy stays close to the full-f32 module output.
    ref3_f32 = _reference(x, w3, bias, g, b, large_filter=False)
    mean_err = float(jnp.mean(jnp.abs(out3 - ref3_f32)))
    assert mean_err < 2e-2, mean_err

    # --- f32 GEMM-operand fallback path (3x3 conv) ---
    out3_f32 = jax.block_until_ready(
        myblock_forward(x, w3, bias, g, b, large_filter=False, conv_dtype=jnp.float32))
    assert out3_f32.shape == (N, Cout, H, W)
    mean_err_f32 = float(jnp.mean(jnp.abs(out3_f32 - ref3_f32)))
    assert mean_err_f32 < 2e-2, mean_err_f32

    # --- large_filter=True (5x5 conv, pad=2), bf16 path ---
    out5 = jax.block_until_ready(myblock_forward(x, w5, bias, g, b, large_filter=True))
    assert out5.shape == (N, Cout, H, W)
    ref5 = _reference(_bf16_round(x), _bf16_round(w5), bias, g, b, large_filter=True)
    err5 = float(jnp.max(jnp.abs(out5 - ref5)))
    assert jnp.allclose(out5, ref5, atol=3e-3, rtol=3e-3), err5

    print("KERNEL_OK")
</pallas_src>

<mosaic_0001>
module attributes {stable_mosaic.version = 11 : i64} {
  func.func @_myblock_kernel(%arg0: i32, %arg1: i32, %arg2: memref<1x4x512xbf16, #tpu.memory_space<vmem>>, %arg3: memref<9x8x4xbf16, #tpu.memory_space<vmem>>, %arg4: memref<3x8x1xf32, #tpu.memory_space<vmem>>, %arg5: memref<1x8x384xf32, #tpu.memory_space<vmem>>) attributes {dimension_semantics = [#tpu.dimension_semantics<parallel>, #tpu.dimension_semantics<parallel>], iteration_bounds = array<i64: 2, 1>, scalar_prefetch = 0 : i64, scratch_operands = 0 : i64, tpu.core_type = #tpu.core_type<tc>, window_params = [{transform_indices = @transform_0, window_bounds = array<i64: 1, 4, 512>}, {pipeline_mode = #tpu.pipeline_mode<synchronous>, transform_indices = @transform_1, window_bounds = array<i64: 9, 8, 4>}, {pipeline_mode = #tpu.pipeline_mode<synchronous>, transform_indices = @transform_2, window_bounds = array<i64: 3, 8, 1>}, {transform_indices = @transform_3, window_bounds = array<i64: 1, 8, 384>}]} {
    %c0 = arith.constant 0 : index
    %c0_0 = arith.constant 0 : index
    %c0_1 = arith.constant 0 : index
    %0 = vector.load %arg2[%c0, %c0_0, %c0_1] : memref<1x4x512xbf16, #tpu.memory_space<vmem>>, vector<1x4x512xbf16>
    %1 = vector.shape_cast %0 : vector<1x4x512xbf16> to vector<4x512xbf16>
    %cst = arith.constant 0.000000e+00 : f32
    %2 = vector.broadcast %cst : f32 to vector<8x384xf32>
    %3 = vector.extract_strided_slice %1 {offsets = [0, 0], sizes = [4, 384], strides = [1, 1]} : vector<4x512xbf16> to vector<4x384xbf16>
    %c0_2 = arith.constant 0 : index
    %c0_3 = arith.constant 0 : index
    %c0_4 = arith.constant 0 : index
    %4 = vector.load %arg3[%c0_2, %c0_3, %c0_4] : memref<9x8x4xbf16, #tpu.memory_space<vmem>>, vector<1x8x4xbf16>
    %5 = vector.shape_cast %4 : vector<1x8x4xbf16> to vector<8x4xbf16>
    %cst_5 = arith.constant dense<0.000000e+00> : vector<8x384xf32>
    %6 = tpu.matmul %5, %3, %cst_5 {dimension_numbers = #tpu.dot_dimension_numbers<[1], [0], [0], [1], [0, 0, 1, 1], [], []>} : vector<8x4xbf16>, vector<4x384xbf16>, vector<8x384xf32> -> vector<8x384xf32>
    %7 = arith.addf %2, %6 : vector<8x384xf32>
    %8 = vector.extract_strided_slice %1 {offsets = [0, 1], sizes = [4, 384], strides = [1, 1]} : vector<4x512xbf16> to vector<4x384xbf16>
    %c1 = arith.constant 1 : index
    %c0_6 = arith.constant 0 : index
    %c0_7 = arith.constant 0 : index
    %9 = vector.load %arg3[%c1, %c0_6, %c0_7] : memref<9x8x4xbf16, #tpu.memory_space<vmem>>, vector<1x8x4xbf16>
    %10 = vector.shape_cast %9 : vector<1x8x4xbf16> to vector<8x4xbf16>
    %cst_8 = arith.constant dense<0.000000e+00> : vector<8x384xf32>
    %11 = tpu.matmul %10, %8, %cst_8 {dimension_numbers = #tpu.dot_dimension_numbers<[1], [0], [0], [1], [0, 0, 1, 1], [], []>} : vector<8x4xbf16>, vector<4x384xbf16>, vector<8x384xf32> -> vector<8x384xf32>
    %12 = arith.addf %7, %11 : vector<8x384xf32>
    %13 = vector.extract_strided_slice %1 {offsets = [0, 2], sizes = [4, 384], strides = [1, 1]} : vector<4x512xbf16> to vector<4x384xbf16>
    %c2 = arith.constant 2 : index
    %c0_9 = arith.constant 0 : index
    %c0_10 = arith.constant 0 : index
    %14 = vector.load %arg3[%c2, %c0_9, %c0_10] : memref<9x8x4xbf16, #tpu.memory_space<vmem>>, vector<1x8x4xbf16>
    %15 = vector.shape_cast %14 : vector<1x8x4xbf16> to vector<8x4xbf16>
    %cst_11 = arith.constant dense<0.000000e+00> : vector<8x384xf32>
    %16 = tpu.matmul %15, %13, %cst_11 {dimension_numbers = #tpu.dot_dimension_numbers<[1], [0], [0], [1], [0, 0, 1, 1], [], []>} : vector<8x4xbf16>, vector<4x384xbf16>, vector<8x384xf32> -> vector<8x384xf32>
    %17 = arith.addf %12, %16 : vector<8x384xf32>
    %18 = vector.extract_strided_slice %1 {offsets = [0, 18], sizes = [4, 384], strides = [1, 1]} : vector<4x512xbf16> to vector<4x384xbf16>
    %c3 = arith.constant 3 : index
    %c0_12 = arith.constant 0 : index
    %c0_13 = arith.constant 0 : index
    %19 = vector.load %arg3[%c3, %c0_12, %c0_13] : memref<9x8x4xbf16, #tpu.memory_space<vmem>>, vector<1x8x4xbf16>
    %20 = vector.shape_cast %19 : vector<1x8x4xbf16> to vector<8x4xbf16>
    %cst_14 = arith.constant dense<0.000000e+00> : vector<8x384xf32>
    %21 = tpu.matmul %20, %18, %cst_14 {dimension_numbers = #tpu.dot_dimension_numbers<[1], [0], [0], [1], [0, 0, 1, 1], [], []>} : vector<8x4xbf16>, vector<4x384xbf16>, vector<8x384xf32> -> vector<8x384xf32>
    %22 = arith.addf %17, %21 : vector<8x384xf32>
    %23 = vector.extract_strided_slice %1 {offsets = [0, 19], sizes = [4, 384], strides = [1, 1]} : vector<4x512xbf16> to vector<4x384xbf16>
    %c4 = arith.constant 4 : index
    %c0_15 = arith.constant 0 : index
    %c0_16 = arith.constant 0 : index
    %24 = vector.load %arg3[%c4, %c0_15, %c0_16] : memref<9x8x4xbf16, #tpu.memory_space<vmem>>, vector<1x8x4xbf16>
    %25 = vector.shape_cast %24 : vector<1x8x4xbf16> to vector<8x4xbf16>
    %cst_17 = arith.constant dense<0.000000e+00> : vector<8x384xf32>
    %26 = tpu.matmul %25, %23, %cst_17 {dimension_numbers = #tpu.dot_dimension_numbers<[1], [0], [0], [1], [0, 0, 1, 1], [], []>} : vector<8x4xbf16>, vector<4x384xbf16>, vector<8x384xf32> -> vector<8x384xf32>
    %27 = arith.addf %22, %26 : vector<8x384xf32>
    %28 = vector.extract_strided_slice %1 {offsets = [0, 20], sizes = [4, 384], strides = [1, 1]} : vector<4x512xbf16> to vector<4x384xbf16>
    %c5 = arith.constant 5 : index
    %c0_18 = arith.constant 0 : index
    %c0_19 = arith.constant 0 : index
    %29 = vector.load %arg3[%c5, %c0_18, %c0_19] : memref<9x8x4xbf16, #tpu.memory_space<vmem>>, vector<1x8x4xbf16>
    %30 = vector.shape_cast %29 : vector<1x8x4xbf16> to vector<8x4xbf16>
    %cst_20 = arith.constant dense<0.000000e+00> : vector<8x384xf32>
    %31 = tpu.matmul %30, %28, %cst_20 {dimension_numbers = #tpu.dot_dimension_numbers<[1], [0], [0], [1], [0, 0, 1, 1], [], []>} : vector<8x4xbf16>, vector<4x384xbf16>, vector<8x384xf32> -> vector<8x384xf32>
    %32 = arith.addf %27, %31 : vector<8x384xf32>
    %33 = vector.extract_strided_slice %1 {offsets = [0, 36], sizes = [4, 384], strides = [1, 1]} : vector<4x512xbf16> to vector<4x384xbf16>
    %c6 = arith.constant 6 : index
    %c0_21 = arith.constant 0 : index
    %c0_22 = arith.constant 0 : index
    %34 = vector.load %arg3[%c6, %c0_21, %c0_22] : memref<9x8x4xbf16, #tpu.memory_space<vmem>>, vector<1x8x4xbf16>
    %35 = vector.shape_cast %34 : vector<1x8x4xbf16> to vector<8x4xbf16>
    %cst_23 = arith.constant dense<0.000000e+00> : vector<8x384xf32>
    %36 = tpu.matmul %35, %33, %cst_23 {dimension_numbers = #tpu.dot_dimension_numbers<[1], [0], [0], [1], [0, 0, 1, 1], [], []>} : vector<8x4xbf16>, vector<4x384xbf16>, vector<8x384xf32> -> vector<8x384xf32>
    %37 = arith.addf %32, %36 : vector<8x384xf32>
    %38 = vector.extract_strided_slice %1 {offsets = [0, 37], sizes = [4, 384], strides = [1, 1]} : vector<4x512xbf16> to vector<4x384xbf16>
    %c7 = arith.constant 7 : index
    %c0_24 = arith.constant 0 : index
    %c0_25 = arith.constant 0 : index
    %39 = vector.load %arg3[%c7, %c0_24, %c0_25] : memref<9x8x4xbf16, #tpu.memory_space<vmem>>, vector<1x8x4xbf16>
    %40 = vector.shape_cast %39 : vector<1x8x4xbf16> to vector<8x4xbf16>
    %cst_26 = arith.constant dense<0.000000e+00> : vector<8x384xf32>
    %41 = tpu.matmul %40, %38, %cst_26 {dimension_numbers = #tpu.dot_dimension_numbers<[1], [0], [0], [1], [0, 0, 1, 1], [], []>} : vector<8x4xbf16>, vector<4x384xbf16>, vector<8x384xf32> -> vector<8x384xf32>
    %42 = arith.addf %37, %41 : vector<8x384xf32>
    %43 = vector.extract_strided_slice %1 {offsets = [0, 38], sizes = [4, 384], strides = [1, 1]} : vector<4x512xbf16> to vector<4x384xbf16>
    %c8 = arith.constant 8 : index
    %c0_27 = arith.constant 0 : index
    %c0_28 = arith.constant 0 : index
    %44 = vector.load %arg3[%c8, %c0_27, %c0_28] : memref<9x8x4xbf16, #tpu.memory_space<vmem>>, vector<1x8x4xbf16>
    %45 = vector.shape_cast %44 : vector<1x8x4xbf16> to vector<8x4xbf16>
    %cst_29 = arith.constant dense<0.000000e+00> : vector<8x384xf32>
    %46 = tpu.matmul %45, %43, %cst_29 {dimension_numbers = #tpu.dot_dimension_numbers<[1], [0], [0], [1], [0, 0, 1, 1], [], []>} : vector<8x4xbf16>, vector<4x384xbf16>, vector<8x384xf32> -> vector<8x384xf32>
    %47 = arith.addf %42, %46 : vector<8x384xf32>
    %c0_30 = arith.constant 0 : index
    %c0_31 = arith.constant 0 : index
    %c0_32 = arith.constant 0 : index
    %48 = vector.load %arg4[%c0_30, %c0_31, %c0_32] : memref<3x8x1xf32, #tpu.memory_space<vmem>>, vector<1x8x1xf32>
    %49 = vector.shape_cast %48 : vector<1x8x1xf32> to vector<8x1xf32>
    %c1_33 = arith.constant 1 : index
    %c0_34 = arith.constant 0 : index
    %c0_35 = arith.constant 0 : index
    %50 = vector.load %arg4[%c1_33, %c0_34, %c0_35] : memref<3x8x1xf32, #tpu.memory_space<vmem>>, vector<1x8x1xf32>
    %51 = vector.shape_cast %50 : vector<1x8x1xf32> to vector<8x1xf32>
    %c2_36 = arith.constant 2 : index
    %c0_37 = arith.constant 0 : index
    %c0_38 = arith.constant 0 : index
    %52 = vector.load %arg4[%c2_36, %c0_37, %c0_38] : memref<3x8x1xf32, #tpu.memory_space<vmem>>, vector<1x8x1xf32>
    %53 = vector.shape_cast %52 : vector<1x8x1xf32> to vector<8x1xf32>
    %54 = vector.broadcast %49 : vector<8x1xf32> to vector<8x384xf32>
    %55 = arith.addf %47, %54 : vector<8x384xf32>
    %cst_39 = arith.constant dense<0.000000e+00> : vector<384xf32>
    %56 = vector.multi_reduction <add>, %55, %cst_39 [0] : vector<8x384xf32> to vector<384xf32>
    %57 = vector.shape_cast %56 : vector<384xf32> to vector<1x384xf32>
    %cst_40 = arith.constant 8.000000e+00 : f32
    %58 = vector.broadcast %cst_40 : f32 to vector<1x384xf32>
    %59 = arith.divf %57, %58 : vector<1x384xf32>
    %60 = vector.broadcast %59 : vector<1x384xf32> to vector<8x384xf32>
    %61 = arith.subf %55, %60 : vector<8x384xf32>
    %62 = arith.mulf %61, %61 : vector<8x384xf32>
    %cst_41 = arith.constant dense<0.000000e+00> : vector<384xf32>
    %63 = vector.multi_reduction <add>, %62, %cst_41 [0] : vector<8x384xf32> to vector<384xf32>
    %64 = vector.shape_cast %63 : vector<384xf32> to vector<1x384xf32>
    %cst_42 = arith.constant 8.000000e+00 : f32
    %65 = vector.broadcast %cst_42 : f32 to vector<1x384xf32>
    %66 = arith.divf %64, %65 : vector<1x384xf32>
    %cst_43 = arith.constant 9.99999974E-6 : f32
    %67 = vector.broadcast %cst_43 : f32 to vector<1x384xf32>
    %68 = arith.addf %66, %67 : vector<1x384xf32>
    %69 = math.rsqrt %68 : vector<1x384xf32>
    %70 = vector.broadcast %69 : vector<1x384xf32> to vector<8x384xf32>
    %71 = arith.mulf %61, %70 : vector<8x384xf32>
    %72 = vector.broadcast %51 : vector<8x1xf32> to vector<8x384xf32>
    %73 = arith.mulf %71, %72 : vector<8x384xf32>
    %74 = vector.broadcast %53 : vector<8x1xf32> to vector<8x384xf32>
    %75 = arith.addf %73, %74 : vector<8x384xf32>
    %cst_44 = arith.constant 0.00999999977 : f32
    %76 = vector.broadcast %cst_44 : f32 to vector<8x384xf32>
    %77 = arith.mulf %76, %75 : vector<8x384xf32>
    %78 = arith.maximumf %75, %77 : vector<8x384xf32>
    %c0_45 = arith.constant 0 : index
    %c0_46 = arith.constant 0 : index
    %c0_47 = arith.constant 0 : index
    %79 = vector.load %arg5[%c0_45, %c0_46, %c0_47] : memref<1x8x384xf32, #tpu.memory_space<vmem>>, vector<1x8x384xf32>
    %80 = vector.shape_cast %79 : vector<1x8x384xf32> to vector<8x384xf32>
    %81 = vector.shape_cast %78 : vector<8x384xf32> to vector<1x8x384xf32>
    tpu.vector_store %arg5[%c0_45, %c0_46, %c0_47], %81 {strides = array<i32>} : memref<1x8x384xf32, #tpu.memory_space<vmem>>, vector<1x8x384xf32>,
    return
  }
  func.func @transform_0(%arg0: i32, %arg1: i32) -> (i32, i32, i32) {
    %c0_i32 = arith.constant 0 : i32
    %c0_i32_0 = arith.constant 0 : i32
    %c0_i32_1 = arith.constant 0 : i32
    return %arg0, %c0_i32, %c0_i32_0 : i32, i32, i32
  }
  func.func @transform_1(%arg0: i32, %arg1: i32) -> (i32, i32, i32) {
    %c0_i32 = arith.constant 0 : i32
    %c0_i32_0 = arith.constant 0 : i32
    %c0_i32_1 = arith.constant 0 : i32
    %c0_i32_2 = arith.constant 0 : i32
    return %c0_i32, %c0_i32_0, %c0_i32_1 : i32, i32, i32
  }
  func.func @transform_2(%arg0: i32, %arg1: i32) -> (i32, i32, i32) {
    %c0_i32 = arith.constant 0 : i32
    %c0_i32_0 = arith.constant 0 : i32
    %c0_i32_1 = arith.constant 0 : i32
    %c0_i32_2 = arith.constant 0 : i32
    return %c0_i32, %c0_i32_0, %c0_i32_1 : i32, i32, i32
  }
  func.func @transform_3(%arg0: i32, %arg1: i32) -> (i32, i32, i32) {
    %c0_i32 = arith.constant 0 : i32
    %c0_i32_0 = arith.constant 0 : i32
    return %arg0, %c0_i32, %arg1 : i32, i32, i32
  }
}

</mosaic_0001>

<llo_original>
// kernel: tpu_custom_call.1
$region0: #{tpu_custom_call.1}
  #allocation0 [shape = 'u32[]', space=smem, size = 0x4, offset = 0x4, fixed_abs, tag = 'smem constant byte address 0x4 - core index']
  #allocation1 [shape = 'u32[144,128]{1,0:T(1,128)}', space=vmem, size = 0x12000, scoped, tag = 'internal scratch']
  %s0 = inlined_call_operand.vmem [shape: bf16[2,4,512], index: 0, kind: input, shape index: {}]
  %s1 = inlined_call_operand.vmem [shape: bf16[9,8,4], index: 1, kind: input, shape index: {}]
  %s2 = inlined_call_operand.vmem [shape: f32[3,8,1], index: 2, kind: input, shape index: {}]
  %s3 = inlined_call_operand.hbm [shape: f32[2,8,384], index: 3, kind: output, shape index: {}]
  %s4 = sld [smem:[#allocation0]]
  $region45: #{tpu_custom_call.1} parent=0
    _
  %s6 = ssub.s32 1, %s4
  %s7 = scalar_select 0, %s6, %s4
  $region1: #{tpu_custom_call.1} parent=0
    #allocation2 [shape = 'u8[24576]{0}', space=vmem, size = 0x6000, scoped, tag = 'output window, operand 0']
    #allocation3 [shape = 's32[2]{0}', space=sflag, size = 0x8, scoped, tag = 'scoped memory for tpu_custom_call.1']
    %8 = vsyncpa [#allocation3], 0
    %s9 = scalar_lea.sflag [#allocation3], 1
    %10 = vsyncpa %s9, 0
    loop: start=0, step=1, limit=4
    $region2: #{tpu_custom_call.1} parent=1 // loop_pre_header
      _
    $region3: #{tpu_custom_call.1} parent=1 // loop_header
      %s12 = sphi 0, %s16
      %p13 = scmp.ge.s32.totalorder %s12, 4
      %s19 = sphi 0, %s31
      %s20 = sphi 0, %s27
      %s21 = sphi 0, %s19
      %s22 = sphi 0, %s20
      %s23 = sphi 0, %s21
      %s24 = sphi 0, %s22
      %s34 = sphi 0, %s36
      %s37 = sphi 0, %s34
      %s38 = sphi 0, %s37
      %s54 = sphi 0, %s38
      %s58 = sphi 0, %s58
      %s60 = sphi 0, %s58
      %s61 = sphi 0, %s60
      %s75 = sphi 0, %s61
      %s79 = sphi 0, %s79
      %s81 = sphi 0, %s79
      %s82 = sphi 0, %s81
      %s96 = sphi 0, %s82
      %s104 = sphi 0, %s106
      %s107 = sphi 0, %s104
      %s108 = sphi 0, %s107
      %s124 = sphi 0, %s108
    $region4: #{tpu_custom_call.1} parent=1 // loop_header_branch
      %15 = sbr.rel (%p13) target = $region8
    $region5: #{tpu_custom_call.1} parent=1 // loop_body
      %s17 = ssub.s32 %s12, 1
      %s18 = ssub.s32 %s12, 2
      %s25 = sadd.s32 1, %s20
      %p26 = scmp.ge.s32.totalorder %s25, 1
      %s27 = scalar_select %p26, 0, %s25
      %s28 = sadd.s32 1, %s19
      %s29 = scalar_select %p26, %s28, %s19
      %p30 = scmp.ge.s32.totalorder %s29, 2
      %s31 = scalar_select %p30, 0, %s29
      %s32 = ssub.s32 %s19, %s31
      %p33 = scmp.eq.s32.totalorder %s32, 0
      %s35 = sadd.s32 %s34, 1
      %s36 = scalar_select %p33, %s34, %s35
      %p39 = pneg %p33
      %p40 = scmp.eq.s32.totalorder %s12, 1
      %p41 = por %p39, %p40
      %p42 = scmp.ne.s32.totalorder %s34, %s37
      %p43 = scmp.eq.s32.totalorder %s12, 0
      %p44 = por %p42, %p43
      %p45 = scmp.ne.s32.totalorder %s34, %s37
      %p46 = scmp.eq.s32.totalorder %s17, 1
      %p47 = por %p45, %p46
      %p48 = scmp.ne.s32.totalorder %s37, %s38
      %p49 = scmp.eq.s32.totalorder %s17, 0
      %p50 = por %p48, %p49
      %p51 = scmp.ne.s32.totalorder %s37, %s38
      %p52 = scmp.eq.s32.totalorder %s18, 1
      %p53 = por %p51, %p52
      %p55 = scmp.ne.s32.totalorder %s38, %s54
      %p56 = scmp.eq.s32.totalorder %s18, 0
      %p57 = por %p55, %p56
      %s59 = sadd.s32 %s58, 1
      %p62 = scmp.eq.s32.totalorder %s12, 1
      %p63 = scmp.ne.s32.totalorder %s58, %s60
      %p64 = scmp.eq.s32.totalorder %s12, 0
      %p65 = por %p63, %p64
      %p66 = scmp.ne.s32.totalorder %s58, %s60
      %p67 = scmp.eq.s32.totalorder %s17, 1
      %p68 = por %p66, %p67
      %p69 = scmp.ne.s32.totalorder %s60, %s61
      %p70 = scmp.eq.s32.totalorder %s17, 0
      %p71 = por %p69, %p70
      %p72 = scmp.ne.s32.totalorder %s60, %s61
      %p73 = scmp.eq.s32.totalorder %s18, 1
      %p74 = por %p72, %p73
      %p76 = scmp.ne.s32.totalorder %s61, %s75
      %p77 = scmp.eq.s32.totalorder %s18, 0
      %p78 = por %p76, %p77
      %s80 = sadd.s32 %s79, 1
      %p83 = scmp.eq.s32.totalorder %s12, 1
      %p84 = scmp.ne.s32.totalorder %s79, %s81
      %p85 = scmp.eq.s32.totalorder %s12, 0
      %p86 = por %p84, %p85
      %p87 = scmp.ne.s32.totalorder %s79, %s81
      %p88 = scmp.eq.s32.totalorder %s17, 1
      %p89 = por %p87, %p88
      %p90 = scmp.ne.s32.totalorder %s81, %s82
      %p91 = scmp.eq.s32.totalorder %s17, 0
      %p92 = por %p90, %p91
      %p93 = scmp.ne.s32.totalorder %s81, %s82
      %p94 = scmp.eq.s32.totalorder %s18, 1
      %p95 = por %p93, %p94
      %p97 = scmp.ne.s32.totalorder %s82, %s96
      %p98 = scmp.eq.s32.totalorder %s18, 0
      %p99 = por %p97, %p98
      %s100 = ssub.s32 %s19, %s31
      %s101 = ssub.s32 %s20, %s27
      %s102 = sor.u32 %s100, %s101
      %p103 = scmp.eq.s32.totalorder %s102, 0
      %s105 = sadd.s32 %s104, 1
      %s106 = scalar_select %p103, %s104, %s105
      %p109 = pneg %p103
      %p110 = scmp.eq.s32.totalorder %s12, 1
      %p111 = por %p109, %p110
      %p112 = scmp.ne.s32.totalorder %s104, %s107
      %p113 = scmp.eq.s32.totalorder %s12, 0
      %p114 = por %p112, %p113
      %p115 = scmp.ne.s32.totalorder %s104, %s107
      %p116 = scmp.eq.s32.totalorder %s17, 1
      %p117 = por %p115, %p116
      %p118 = scmp.ne.s32.totalorder %s107, %s108
      %p119 = scmp.eq.s32.totalorder %s17, 0
      %p120 = por %p118, %p119
      %p121 = scmp.ne.s32.totalorder %s107, %s108
      %p122 = scmp.eq.s32.totalorder %s18, 1
      %p123 = por %p121, %p122
      %p125 = scmp.ne.s32.totalorder %s108, %s124
      %p126 = scmp.eq.s32.totalorder %s18, 0
      %p127 = por %p125, %p126
      %p128 = scmp.le.s32.totalorder 1, %s12
      %p129 = scmp.lt.s32.totalorder %s12, 3
      %p130 = pnand %p128, %p129
      %p131 = pneg %p130
      // Predicated region
      $region9: #{tpu_custom_call.1} parent=5 // pred_check
        _
      $region10: #{tpu_custom_call.1} parent=5 // pred_check_branch
        %133 = sbr.rel (%p130) target = $region12
      $region11: #{tpu_custom_call.1} parent=5 // pred_region
        %s134 = ssub.s32 %s12, 1
        // Predicated region
        $region13: #{tpu_custom_call.1} parent=11 // pred_check
          %p135 = pneg %p71
        $region14: #{tpu_custom_call.1} parent=11 // pred_check_branch
          %137 = sbr.rel (%p135) target = $region16
        $region15: #{tpu_custom_call.1} parent=11 // pred_region
          _
        $region16: #{tpu_custom_call.1} parent=11 // pred_fallthru
          _
        // Predicated region
        $region17: #{tpu_custom_call.1} parent=11 // pred_check
          %p138 = pneg %p92
        $region18: #{tpu_custom_call.1} parent=11 // pred_check_branch
          %140 = sbr.rel (%p138) target = $region20
        $region19: #{tpu_custom_call.1} parent=11 // pred_region
          _
        $region20: #{tpu_custom_call.1} parent=11 // pred_fallthru
          _
      $region12: #{tpu_custom_call.1} parent=5 // pred_fallthru
        _
      %p141 = scmp.lt.s32.totalorder %s12, 2
      // Predicated region
      $region21: #{tpu_custom_call.1} parent=5 // pred_check
        %p142 = pneg %p141
      $region22: #{tpu_custom_call.1} parent=5 // pred_check_branch
        %144 = sbr.rel (%p142) target = $region24
      $region23: #{tpu_custom_call.1} parent=5 // pred_region
        // Predicated region
        $region25: #{tpu_custom_call.1} parent=23 // pred_check
          %p145 = pneg %p44
        $region26: #{tpu_custom_call.1} parent=23 // pred_check_branch
          %147 = sbr.rel (%p145) target = $region28
        $region27: #{tpu_custom_call.1} parent=23 // pred_region
          %p148 = scmp.lt.s32.totalorder %s19, 1
          %s149 = scalar_select %p148, %s19, 1
          %s150 = smul.addr %s149, 4
          %s151 = smul.addr %s150, 2
          %s152 = scalar_lea.vmem %s0, %s151
        $region28: #{tpu_custom_call.1} parent=23 // pred_fallthru
          _
      $region24: #{tpu_custom_call.1} parent=5 // pred_fallthru
        _
      %p153 = scmp.le.s32.totalorder 1, %s12
      %p154 = scmp.lt.s32.totalorder %s12, 3
      %p155 = pnand %p153, %p154
      %p156 = pneg %p155
      // Predicated region
      $region29: #{tpu_custom_call.1} parent=5 // pred_check
        _
      $region30: #{tpu_custom_call.1} parent=5 // pred_check_branch
        %158 = sbr.rel (%p155) target = $region32
      $region31: #{tpu_custom_call.1} parent=5 // pred_region
        %s159 = ssub.s32 %s12, 1
        %p160 = scmp.lt.s32.totalorder %s21, 1
        %s161 = scalar_select %p160, %s21, 1
        %s162 = smul.addr %s161, 4
        %s163 = smul.addr %s162, 2
        %s164 = scalar_lea.vmem %s0, %s163
        %p165 = pneg %p50
        %p166 = pneg %p47
        %p167 = pneg %p71
        %p168 = pneg %p68
        %p169 = pneg %p92
        %p170 = pneg %p89
        %p171 = pneg %p120
        %p172 = pneg %p117
        %s173 = sand.u32 %s107, 1
        %s174 = scalar_lea.sflag [#allocation3], %s173
        %s175 = sand.u32 %s107, 1
        %s176 = smul.addr %s175, 24
        %s177 = scalar_lea.vmem [#allocation2], %s176
        %p178 = scmp.lt.s32.totalorder %s21, 1
        %s179 = scalar_select %p178, %s21, 1
        %s180 = smul.addr %s179, 4
        %s181 = smul.addr %s180, 2
        %s182 = scalar_lea.vmem %s0, %s181
        %s183 = smul.u32 3, %s22
        %v185 = vld [vmem:[%s182] sm:$0xff]
        %v186 = vld [vmem:[%s1] sm:$0xf]
        %s187 = scalar_lea.vmem %s1, 4
        %v188 = vld [vmem:[%s187] sm:$0xf]
        %v190 = vcombine.high %v185, %v185
        %v192 = vunpack.c.l.s4 1983009808
        %v193 = vunpack.c.0.s8 %v192
        %v194 = vlaneseq
        %v195 = vshrl.u32 %v194, 7
        %v196 = vsub.s32 %v193, %v195
        %v197 = vrot.slane %v185, %v196
        %v199 = vunpack.c.l.s4 1983009808
        %v200 = vunpack.c.0.s8 %v199
        %v201 = vlaneseq
        %v202 = vshrl.u32 %v201, 7
        %v203 = vsub.s32 %v200, %v202
        %v204 = vrot.slane %v190, %v203
        %v205 = vcombine.high %v197, %v197
        %v206 = vcombine.high %v204, %v204
        %207 = vrot.lane.b32.xlu0 %v197, 127
        %v208 = vpop.permute.xlu0 %207
        %209 = vrot.lane.b32.xlu0 %v205, 127
        %v210 = vpop.permute.xlu0 %209
        %211 = vrot.lane.b32.xlu0 %v204, 127
        %v212 = vpop.permute.xlu0 %211
        %213 = vrot.lane.b32.xlu0 %v206, 127
        %v214 = vpop.permute.xlu0 %213
        %vm215 = vcmask 1039360
        %v216 = vsel %vm215, %v208, %v210
        %v217 = vsel %vm215, %v210, %v212
        %v218 = vsel %vm215, %v212, %v214
        %vm219 = vcmask 31744
        %v221 = vsel %vm219, %v188, 0
        %vm223 = vcmask 1041408
        %v225 = vsel %vm223, %v216, 0
        %v228 = vsel %vm223, %v217, 0
        %v231 = vsel %vm223, %v218, 0
        %233 = vmatprep.subr.bf16.mxu0 0
        %234 = vmatpush1.bf16.msra.mxu0 0
        %235 = vmatprep.subr.bf16.mxu0 0
        %236 = vmatpush1.bf16.msra.mxu0 0
        %237 = vmatprep.subr.bf16.mxu0 0
        %238 = vmatpush1.bf16.msra.mxu0 0
        %239 = vmatprep.subr.bf16.mxu0 0
        %240 = vmatpush1.bf16.msra.mxu0 0
        %241 = vmatprep.subr.bf16.mxu0 0
        %242 = vmatpush1.bf16.msra.mxu0 0
        %243 = vmatprep.subr.bf16.mxu0 0
        %244 = vmatpush1.bf16.msra.mxu0 0
        %245 = vmatprep.subr.bf16.mxu0 0
        %246 = vmatpush1.bf16.msra.mxu0 0
        %247 = vmatprep.subr.bf16.mxu0 %v228
        %248 = vmatpush1.bf16.msra.mxu0 %v225
        %249 = vmatprep.subr.bf16.mxu0 0
        %250 = vmatpush2.bf16.msra.mxu0 0
        %251 = vmatprep.subr.bf16.mxu0 0
        %252 = vmatpush2.bf16.msra.mxu0 0
        %253 = vmatprep.subr.bf16.mxu0 0
        %254 = vmatpush2.bf16.msra.mxu0 0
        %255 = vmatprep.subr.bf16.mxu0 0
        %256 = vmatpush2.bf16.msra.mxu0 0
        %257 = vmatprep.subr.bf16.mxu0 0
        %258 = vmatpush2.bf16.msra.mxu0 0
        %259 = vmatprep.subr.bf16.mxu0 0
        %260 = vmatpush2.bf16.msra.mxu0 0
        %261 = vmatprep.subr.bf16.mxu0 0
        %262 = vmatpush2.bf16.msra.mxu0 0
        %263 = vmatprep.subr.bf16.mxu0 0
        %264 = vmatpush2.bf16.msra.mxu0 0
        %265 = vmatprep.mubr.bf16.mxu0 0
        %266 = vmatmul.mubr.bf16.gmra.mxu0 %v221
        %v267 = vpop.f32.mrf.mxu0
        %v268 = vadd.f32 0.0, %v267
        %v269 = vpop.f32.mrf.mxu0
        %v270 = vadd.f32 0.0, %v269
        %v271 = vpop.f32.mrf.mxu0
        %v272 = vpop.f32.mrf.mxu0
        %273 = vdwg.mxu0
        %274 = vmatprep.subr.bf16.mxu0 0
        %275 = vmatpush1.bf16.msra.mxu0 0
        %276 = vmatprep.subr.bf16.mxu0 0
        %277 = vmatpush1.bf16.msra.mxu0 0
        %278 = vmatprep.subr.bf16.mxu0 0
        %279 = vmatpush1.bf16.msra.mxu0 0
        %280 = vmatprep.subr.bf16.mxu0 0
        %281 = vmatpush1.bf16.msra.mxu0 0
        %282 = vmatprep.subr.bf16.mxu0 0
        %283 = vmatpush1.bf16.msra.mxu0 0
        %284 = vmatprep.subr.bf16.mxu0 0
        %285 = vmatpush1.bf16.msra.mxu0 0
        %286 = vmatprep.subr.bf16.mxu0 0
        %287 = vmatpush1.bf16.msra.mxu0 0
        %288 = vmatprep.subr.bf16.mxu0 0
        %289 = vmatpush1.bf16.msra.mxu0 %v231
        %290 = vmatprep.subr.bf16.mxu0 0
        %291 = vmatpush2.bf16.msra.mxu0 0
        %292 = vmatprep.subr.bf16.mxu0 0
        %293 = vmatpush2.bf16.msra.mxu0 0
        %294 = vmatprep.subr.bf16.mxu0 0
        %295 = vmatpush2.bf16.msra.mxu0 0
        %296 = vmatprep.subr.bf16.mxu0 0
        %297 = vmatpush2.bf16.msra.mxu0 0
        %298 = vmatprep.subr.bf16.mxu0 0
        %299 = vmatpush2.bf16.msra.mxu0 0
        %300 = vmatprep.subr.bf16.mxu0 0
        %301 = vmatpush2.bf16.msra.mxu0 0
        %302 = vmatprep.subr.bf16.mxu0 0
        %303 = vmatpush2.bf16.msra.mxu0 0
        %304 = vmatprep.subr.bf16.mxu0 0
        %305 = vmatpush2.bf16.msra.mxu0 0
        %306 = vmatprep.mubr.bf16.mxu0 0
        %307 = vmatmul.mubr.bf16.gmra.mxu0 %v221
        %v308 = vpop.f32.mrf.mxu0
        %v309 = vadd.f32 0.0, %v308
        %v310 = vpop.f32.mrf.mxu0
        %v311 = vpop.f32.mrf.mxu0
        %v312 = vpop.f32.mrf.mxu0
        %313 = vdwg.mxu0
        %v315 = vsel %vm219, %v186, 0
        %v318 = vsel %vm223, %v197, 0
        %v321 = vsel %vm223, %v205, 0
        %v324 = vsel %vm223, %v204, 0
        %326 = vmatprep.subr.bf16.mxu0 0
        %327 = vmatpush1.bf16.msra.mxu0 0
        %328 = vmatprep.subr.bf16.mxu0 0
        %329 = vmatpush1.bf16.msra.mxu0 0
        %330 = vmatprep.subr.bf16.mxu0 0
        %331 = vmatpush1.bf16.msra.mxu0 0
        %332 = vmatprep.subr.bf16.mxu0 0
        %333 = vmatpush1.bf16.msra.mxu0 0
        %334 = vmatprep.subr.bf16.mxu0 0
        %335 = vmatpush1.bf16.msra.mxu0 0
        %336 = vmatprep.subr.bf16.mxu0 0
        %337 = vmatpush1.bf16.msra.mxu0 0
        %338 = vmatprep.subr.bf16.mxu0 0
        %339 = vmatpush1.bf16.msra.mxu0 0
        %340 = vmatprep.subr.bf16.mxu0 %v321
        %341 = vmatpush1.bf16.msra.mxu0 %v318
        %342 = vmatprep.subr.bf16.mxu0 0
        %343 = vmatpush2.bf16.msra.mxu0 0
        %344 = vmatprep.subr.bf16.mxu0 0
        %345 = vmatpush2.bf16.msra.mxu0 0
        %346 = vmatprep.subr.bf16.mxu0 0
        %347 = vmatpush2.bf16.msra.mxu0 0
        %348 = vmatprep.subr.bf16.mxu0 0
        %349 = vmatpush2.bf16.msra.mxu0 0
        %350 = vmatprep.subr.bf16.mxu0 0
        %351 = vmatpush2.bf16.msra.mxu0 0
        %352 = vmatprep.subr.bf16.mxu0 0
        %353 = vmatpush2.bf16.msra.mxu0 0
        %354 = vmatprep.subr.bf16.mxu0 0
        %355 = vmatpush2.bf16.msra.mxu0 0
        %356 = vmatprep.subr.bf16.mxu0 0
        %357 = vmatpush2.bf16.msra.mxu0 0
        %358 = vmatprep.mubr.bf16.mxu0 0
        %359 = vmatmul.mubr.bf16.gmra.mxu0 %v315
        %v360 = vpop.f32.mrf.mxu0
        %v361 = vadd.f32 %v268, %v360
        %v362 = vpop.f32.mrf.mxu0
        %v363 = vadd.f32 %v270, %v362
        %v364 = vpop.f32.mrf.mxu0
        %v365 = vpop.f32.mrf.mxu0
        %366 = vdwg.mxu0
        %367 = vmatprep.subr.bf16.mxu0 0
        %368 = vmatpush1.bf16.msra.mxu0 0
        %369 = vmatprep.subr.bf16.mxu0 0
        %370 = vmatpush1.bf16.msra.mxu0 0
        %371 = vmatprep.subr.bf16.mxu0 0
        %372 = vmatpush1.bf16.msra.mxu0 0
        %373 = vmatprep.subr.bf16.mxu0 0
        %374 = vmatpush1.bf16.msra.mxu0 0
        %375 = vmatprep.subr.bf16.mxu0 0
        %376 = vmatpush1.bf16.msra.mxu0 0
        %377 = vmatprep.subr.bf16.mxu0 0
        %378 = vmatpush1.bf16.msra.mxu0 0
        %379 = vmatprep.subr.bf16.mxu0 0
        %380 = vmatpush1.bf16.msra.mxu0 0
        %381 = vmatprep.subr.bf16.mxu0 0
        %382 = vmatpush1.bf16.msra.mxu0 %v324
        %383 = vmatprep.subr.bf16.mxu0 0
        %384 = vmatpush2.bf16.msra.mxu0 0
        %385 = vmatprep.subr.bf16.mxu0 0
        %386 = vmatpush2.bf16.msra.mxu0 0
        %387 = vmatprep.subr.bf16.mxu0 0
        %388 = vmatpush2.bf16.msra.mxu0 0
        %389 = vmatprep.subr.bf16.mxu0 0
        %390 = vmatpush2.bf16.msra.mxu0 0
        %391 = vmatprep.subr.bf16.mxu0 0
        %392 = vmatpush2.bf16.msra.mxu0 0
        %393 = vmatprep.subr.bf16.mxu0 0
        %394 = vmatpush2.bf16.msra.mxu0 0
        %395 = vmatprep.subr.bf16.mxu0 0
        %396 = vmatpush2.bf16.msra.mxu0 0
        %397 = vmatprep.subr.bf16.mxu0 0
        %398 = vmatpush2.bf16.msra.mxu0 0
        %399 = vmatprep.mubr.bf16.mxu0 0
        %400 = vmatmul.mubr.bf16.gmra.mxu0 %v315
        %v401 = vpop.f32.mrf.mxu0
        %v402 = vadd.f32 %v309, %v401
        %v403 = vpop.f32.mrf.mxu0
        %v404 = vpop.f32.mrf.mxu0
        %v405 = vpop.f32.mrf.mxu0
        %406 = vdwg.mxu0
        %s407 = scalar_lea.vmem %s1, 8
        %v408 = vld [vmem:[%s407] sm:$0xf]
        %409 = vrot.lane.b32.xlu0 %v197, 126
        %v410 = vpop.permute.xlu0 %409
        %411 = vrot.lane.b32.xlu0 %v205, 126
        %v412 = vpop.permute.xlu0 %411
        %413 = vrot.lane.b32.xlu0 %v204, 126
        %v414 = vpop.permute.xlu0 %413
        %415 = vrot.lane.b32.xlu0 %v206, 126
        %v416 = vpop.permute.xlu0 %415
        %vm417 = vcmask 1031168
        %v418 = vsel %vm417, %v410, %v412
        %v419 = vsel %vm417, %v412, %v414
        %v420 = vsel %vm417, %v414, %v416
        %v422 = vsel %vm219, %v408, 0
        %v425 = vsel %vm223, %v418, 0
        %v428 = vsel %vm223, %v419, 0
        %v431 = vsel %vm223, %v420, 0
        %433 = vmatprep.subr.bf16.mxu0 0
        %434 = vmatpush1.bf16.msra.mxu0 0
        %435 = vmatprep.subr.bf16.mxu0 0
        %436 = vmatpush1.bf16.msra.mxu0 0
        %437 = vmatprep.subr.bf16.mxu0 0
        %438 = vmatpush1.bf16.msra.mxu0 0
        %439 = vmatprep.subr.bf16.mxu0 0
        %440 = vmatpush1.bf16.msra.mxu0 0
        %441 = vmatprep.subr.bf16.mxu0 0
        %442 = vmatpush1.bf16.msra.mxu0 0
        %443 = vmatprep.subr.bf16.mxu0 0
        %444 = vmatpush1.bf16.msra.mxu0 0
        %445 = vmatprep.subr.bf16.mxu0 0
        %446 = vmatpush1.bf16.msra.mxu0 0
        %447 = vmatprep.subr.bf16.mxu0 %v428
        %448 = vmatpush1.bf16.msra.mxu0 %v425
        %449 = vmatprep.subr.bf16.mxu0 0
        %450 = vmatpush2.bf16.msra.mxu0 0
        %451 = vmatprep.subr.bf16.mxu0 0
        %452 = vmatpush2.bf16.msra.mxu0 0
        %453 = vmatprep.subr.bf16.mxu0 0
        %454 = vmatpush2.bf16.msra.mxu0 0
        %455 = vmatprep.subr.bf16.mxu0 0
        %456 = vmatpush2.bf16.msra.mxu0 0
        %457 = vmatprep.subr.bf16.mxu0 0
        %458 = vmatpush2.bf16.msra.mxu0 0
        %459 = vmatprep.subr.bf16.mxu0 0
        %460 = vmatpush2.bf16.msra.mxu0 0
        %461 = vmatprep.subr.bf16.mxu0 0
        %462 = vmatpush2.bf16.msra.mxu0 0
        %463 = vmatprep.subr.bf16.mxu0 0
        %464 = vmatpush2.bf16.msra.mxu0 0
        %465 = vmatprep.mubr.bf16.mxu0 0
        %466 = vmatmul.mubr.bf16.gmra.mxu0 %v422
        %v467 = vpop.f32.mrf.mxu0
        %v468 = vadd.f32 0.0, %v467
        %v469 = vpop.f32.mrf.mxu0
        %v470 = vadd.f32 0.0, %v469
        %v471 = vpop.f32.mrf.mxu0
        %v472 = vpop.f32.mrf.mxu0
        %473 = vdwg.mxu0
        %474 = vmatprep.subr.bf16.mxu0 0
        %475 = vmatpush1.bf16.msra.mxu0 0
        %476 = vmatprep.subr.bf16.mxu0 0
        %477 = vmatpush1.bf16.msra.mxu0 0
        %478 = vmatprep.subr.bf16.mxu0 0
        %479 = vmatpush1.bf16.msra.mxu0 0
        %480 = vmatprep.subr.bf16.mxu0 0
        %481 = vmatpush1.bf16.msra.mxu0 0
        %482 = vmatprep.subr.bf16.mxu0 0
        %483 = vmatpush1.bf16.msra.mxu0 0
        %484 = vmatprep.subr.bf16.mxu0 0
        %485 = vmatpush1.bf16.msra.mxu0 0
        %486 = vmatprep.subr.bf16.mxu0 0
        %487 = vmatpush1.bf16.msra.mxu0 0
        %488 = vmatprep.subr.bf16.mxu0 0
        %489 = vmatpush1.bf16.msra.mxu0 %v431
        %490 = vmatprep.subr.bf16.mxu0 0
        %491 = vmatpush2.bf16.msra.mxu0 0
        %492 = vmatprep.subr.bf16.mxu0 0
        %493 = vmatpush2.bf16.msra.mxu0 0
        %494 = vmatprep.subr.bf16.mxu0 0
        %495 = vmatpush2.bf16.msra.mxu0 0
        %496 = vmatprep.subr.bf16.mxu0 0
        %497 = vmatpush2.bf16.msra.mxu0 0
        %498 = vmatprep.subr.bf16.mxu0 0
        %499 = vmatpush2.bf16.msra.mxu0 0
        %500 = vmatprep.subr.bf16.mxu0 0
        %501 = vmatpush2.bf16.msra.mxu0 0
        %502 = vmatprep.subr.bf16.mxu0 0
        %503 = vmatpush2.bf16.msra.mxu0 0
        %504 = vmatprep.subr.bf16.mxu0 0
        %505 = vmatpush2.bf16.msra.mxu0 0
        %506 = vmatprep.mubr.bf16.mxu0 0
        %507 = vmatmul.mubr.bf16.gmra.mxu0 %v422
        %v508 = vpop.f32.mrf.mxu0
        %v509 = vadd.f32 0.0, %v508
        %v510 = vpop.f32.mrf.mxu0
        %v511 = vpop.f32.mrf.mxu0
        %v512 = vpop.f32.mrf.mxu0
        %513 = vdwg.mxu0
        %v514 = vadd.f32 %v361, %v468
        %v515 = vadd.f32 %v363, %v470
        %v516 = vadd.f32 %v402, %v509
        %s517 = scalar_lea.vmem %s1, 12
        %v518 = vld [vmem:[%s517] sm:$0xf]
        %519 = vrot.lane.b32.xlu0 %v197, 110
        %v520 = vpop.permute.xlu0 %519
        %521 = vrot.lane.b32.xlu0 %v205, 110
        %v522 = vpop.permute.xlu0 %521
        %523 = vrot.lane.b32.xlu0 %v204, 110
        %v524 = vpop.permute.xlu0 %523
        %525 = vrot.lane.b32.xlu0 %v206, 110
        %v526 = vpop.permute.xlu0 %525
        %vm527 = vcmask 900096
        %v528 = vsel %vm527, %v520, %v522
        %v529 = vsel %vm527, %v522, %v524
        %v530 = vsel %vm527, %v524, %v526
        %v532 = vsel %vm219, %v518, 0
        %v535 = vsel %vm223, %v528, 0
        %v538 = vsel %vm223, %v529, 0
        %v541 = vsel %vm223, %v530, 0
        %543 = vmatprep.subr.bf16.mxu0 0
        %544 = vmatpush1.bf16.msra.mxu0 0
        %545 = vmatprep.subr.bf16.mxu0 0
        %546 = vmatpush1.bf16.msra.mxu0 0
        %547 = vmatprep.subr.bf16.mxu0 0
        %548 = vmatpush1.bf16.msra.mxu0 0
        %549 = vmatprep.subr.bf16.mxu0 0
        %550 = vmatpush1.bf16.msra.mxu0 0
        %551 = vmatprep.subr.bf16.mxu0 0
        %552 = vmatpush1.bf16.msra.mxu0 0
        %553 = vmatprep.subr.bf16.mxu0 0
        %554 = vmatpush1.bf16.msra.mxu0 0
        %555 = vmatprep.subr.bf16.mxu0 0
        %556 = vmatpush1.bf16.msra.mxu0 0
        %557 = vmatprep.subr.bf16.mxu0 %v538
        %558 = vmatpush1.bf16.msra.mxu0 %v535
        %559 = vmatprep.subr.bf16.mxu0 0
        %560 = vmatpush2.bf16.msra.mxu0 0
        %561 = vmatprep.subr.bf16.mxu0 0
        %562 = vmatpush2.bf16.msra.mxu0 0
        %563 = vmatprep.subr.bf16.mxu0 0
        %564 = vmatpush2.bf16.msra.mxu0 0
        %565 = vmatprep.subr.bf16.mxu0 0
        %566 = vmatpush2.bf16.msra.mxu0 0
        %567 = vmatprep.subr.bf16.mxu0 0
        %568 = vmatpush2.bf16.msra.mxu0 0
        %569 = vmatprep.subr.bf16.mxu0 0
        %570 = vmatpush2.bf16.msra.mxu0 0
        %571 = vmatprep.subr.bf16.mxu0 0
        %572 = vmatpush2.bf16.msra.mxu0 0
        %573 = vmatprep.subr.bf16.mxu0 0
        %574 = vmatpush2.bf16.msra.mxu0 0
        %575 = vmatprep.mubr.bf16.mxu0 0
        %576 = vmatmul.mubr.bf16.gmra.mxu0 %v532
        %v577 = vpop.f32.mrf.mxu0
        %v578 = vadd.f32 0.0, %v577
        %v579 = vpop.f32.mrf.mxu0
        %v580 = vadd.f32 0.0, %v579
        %v581 = vpop.f32.mrf.mxu0
        %v582 = vpop.f32.mrf.mxu0
        %583 = vdwg.mxu0
        %584 = vmatprep.subr.bf16.mxu0 0
        %585 = vmatpush1.bf16.msra.mxu0 0
        %586 = vmatprep.subr.bf16.mxu0 0
        %587 = vmatpush1.bf16.msra.mxu0 0
        %588 = vmatprep.subr.bf16.mxu0 0
        %589 = vmatpush1.bf16.msra.mxu0 0
        %590 = vmatprep.subr.bf16.mxu0 0
        %591 = vmatpush1.bf16.msra.mxu0 0
        %592 = vmatprep.subr.bf16.mxu0 0
        %593 = vmatpush1.bf16.msra.mxu0 0
        %594 = vmatprep.subr.bf16.mxu0 0
        %595 = vmatpush1.bf16.msra.mxu0 0
        %596 = vmatprep.subr.bf16.mxu0 0
        %597 = vmatpush1.bf16.msra.mxu0 0
        %598 = vmatprep.subr.bf16.mxu0 0
        %599 = vmatpush1.bf16.msra.mxu0 %v541
        %600 = vmatprep.subr.bf16.mxu0 0
        %601 = vmatpush2.bf16.msra.mxu0 0
        %602 = vmatprep.subr.bf16.mxu0 0
        %603 = vmatpush2.bf16.msra.mxu0 0
        %604 = vmatprep.subr.bf16.mxu0 0
        %605 = vmatpush2.bf16.msra.mxu0 0
        %606 = vmatprep.subr.bf16.mxu0 0
        %607 = vmatpush2.bf16.msra.mxu0 0
        %608 = vmatprep.subr.bf16.mxu0 0
        %609 = vmatpush2.bf16.msra.mxu0 0
        %610 = vmatprep.subr.bf16.mxu0 0
        %611 = vmatpush2.bf16.msra.mxu0 0
        %612 = vmatprep.subr.bf16.mxu0 0
        %613 = vmatpush2.bf16.msra.mxu0 0
        %614 = vmatprep.subr.bf16.mxu0 0
        %615 = vmatpush2.bf16.msra.mxu0 0
        %616 = vmatprep.mubr.bf16.mxu0 0
        %617 = vmatmul.mubr.bf16.gmra.mxu0 %v532
        %v618 = vpop.f32.mrf.mxu0
        %v619 = vadd.f32 0.0, %v618
        %v620 = vpop.f32.mrf.mxu0
        %v621 = vpop.f32.mrf.mxu0
        %v622 = vpop.f32.mrf.mxu0
        %623 = vdwg.mxu0
        %v624 = vadd.f32 %v514, %v578
        %v625 = vadd.f32 %v515, %v580
        %v626 = vadd.f32 %v516, %v619
        %s627 = scalar_lea.vmem %s1, 16
        %v628 = vld [vmem:[%s627] sm:$0xf]
        %629 = vrot.lane.b32.xlu0 %v197, 109
        %v630 = vpop.permute.xlu0 %629
        %631 = vrot.lane.b32.xlu0 %v205, 109
        %v632 = vpop.permute.xlu0 %631
        %633 = vrot.lane.b32.xlu0 %v204, 109
        %v634 = vpop.permute.xlu0 %633
        %635 = vrot.lane.b32.xlu0 %v206, 109
        %v636 = vpop.permute.xlu0 %635
        %vm637 = vcmask 891904
        %v638 = vsel %vm637, %v630, %v632
        %v639 = vsel %vm637, %v632, %v634
        %v640 = vsel %vm637, %v634, %v636
        %v642 = vsel %vm219, %v628, 0
        %v645 = vsel %vm223, %v638, 0
        %v648 = vsel %vm223, %v639, 0
        %v651 = vsel %vm223, %v640, 0
        %653 = vmatprep.subr.bf16.mxu0 0
        %654 = vmatpush1.bf16.msra.mxu0 0
        %655 = vmatprep.subr.bf16.mxu0 0
        %656 = vmatpush1.bf16.msra.mxu0 0
        %657 = vmatprep.subr.bf16.mxu0 0
        %658 = vmatpush1.bf16.msra.mxu0 0
        %659 = vmatprep.subr.bf16.mxu0 0
        %660 = vmatpush1.bf16.msra.mxu0 0
        %661 = vmatprep.subr.bf16.mxu0 0
        %662 = vmatpush1.bf16.msra.mxu0 0
        %663 = vmatprep.subr.bf16.mxu0 0
        %664 = vmatpush1.bf16.msra.mxu0 0
        %665 = vmatprep.subr.bf16.mxu0 0
        %666 = vmatpush1.bf16.msra.mxu0 0
        %667 = vmatprep.subr.bf16.mxu0 %v648
        %668 = vmatpush1.bf16.msra.mxu0 %v645
        %669 = vmatprep.subr.bf16.mxu0 0
        %670 = vmatpush2.bf16.msra.mxu0 0
        %671 = vmatprep.subr.bf16.mxu0 0
        %672 = vmatpush2.bf16.msra.mxu0 0
        %673 = vmatprep.subr.bf16.mxu0 0
        %674 = vmatpush2.bf16.msra.mxu0 0
        %675 = vmatprep.subr.bf16.mxu0 0
        %676 = vmatpush2.bf16.msra.mxu0 0
        %677 = vmatprep.subr.bf16.mxu0 0
        %678 = vmatpush2.bf16.msra.mxu0 0
        %679 = vmatprep.subr.bf16.mxu0 0
        %680 = vmatpush2.bf16.msra.mxu0 0
        %681 = vmatprep.subr.bf16.mxu0 0
        %682 = vmatpush2.bf16.msra.mxu0 0
        %683 = vmatprep.subr.bf16.mxu0 0
        %684 = vmatpush2.bf16.msra.mxu0 0
        %685 = vmatprep.mubr.bf16.mxu0 0
        %686 = vmatmul.mubr.bf16.gmra.mxu0 %v642
        %v687 = vpop.f32.mrf.mxu0
        %v688 = vadd.f32 0.0, %v687
        %v689 = vpop.f32.mrf.mxu0
        %v690 = vadd.f32 0.0, %v689
        %v691 = vpop.f32.mrf.mxu0
        %v692 = vpop.f32.mrf.mxu0
        %693 = vdwg.mxu0
        %694 = vmatprep.subr.bf16.mxu0 0
        %695 = vmatpush1.bf16.msra.mxu0 0
        %696 = vmatprep.subr.bf16.mxu0 0
        %697 = vmatpush1.bf16.msra.mxu0 0
        %698 = vmatprep.subr.bf16.mxu0 0
        %699 = vmatpush1.bf16.msra.mxu0 0
        %700 = vmatprep.subr.bf16.mxu0 0
        %701 = vmatpush1.bf16.msra.mxu0 0
        %702 = vmatprep.subr.bf16.mxu0 0
        %703 = vmatpush1.bf16.msra.mxu0 0
        %704 = vmatprep.subr.bf16.mxu0 0
        %705 = vmatpush1.bf16.msra.mxu0 0
        %706 = vmatprep.subr.bf16.mxu0 0
        %707 = vmatpush1.bf16.msra.mxu0 0
        %708 = vmatprep.subr.bf16.mxu0 0
        %709 = vmatpush1.bf16.msra.mxu0 %v651
        %710 = vmatprep.subr.bf16.mxu0 0
        %711 = vmatpush2.bf16.msra.mxu0 0
        %712 = vmatprep.subr.bf16.mxu0 0
        %713 = vmatpush2.bf16.msra.mxu0 0
        %714 = vmatprep.subr.bf16.mxu0 0
        %715 = vmatpush2.bf16.msra.mxu0 0
        %716 = vmatprep.subr.bf16.mxu0 0
        %717 = vmatpush2.bf16.msra.mxu0 0
        %718 = vmatprep.subr.bf16.mxu0 0
        %719 = vmatpush2.bf16.msra.mxu0 0
        %720 = vmatprep.subr.bf16.mxu0 0
        %721 = vmatpush2.bf16.msra.mxu0 0
        %722 = vmatprep.subr.bf16.mxu0 0
        %723 = vmatpush2.bf16.msra.mxu0 0
        %724 = vmatprep.subr.bf16.mxu0 0
        %725 = vmatpush2.bf16.msra.mxu0 0
        %726 = vmatprep.mubr.bf16.mxu0 0
        %727 = vmatmul.mubr.bf16.gmra.mxu0 %v642
        %v728 = vpop.f32.mrf.mxu0
        %v729 = vadd.f32 0.0, %v728
        %v730 = vpop.f32.mrf.mxu0
        %v731 = vpop.f32.mrf.mxu0
        %v732 = vpop.f32.mrf.mxu0
        %733 = vdwg.mxu0
        %v734 = vadd.f32 %v624, %v688
        %v735 = vadd.f32 %v625, %v690
        %v736 = vadd.f32 %v626, %v729
        %s737 = scalar_lea.vmem %s1, 20
        %v738 = vld [vmem:[%s737] sm:$0xf]
        %739 = vrot.lane.b32.xlu0 %v197, 108
        %v740 = vpop.permute.xlu0 %739
        %741 = vrot.lane.b32.xlu0 %v205, 108
        %v742 = vpop.permute.xlu0 %741
        %743 = vrot.lane.b32.xlu0 %v204, 108
        %v744 = vpop.permute.xlu0 %743
        %745 = vrot.lane.b32.xlu0 %v206, 108
        %v746 = vpop.permute.xlu0 %745
        %vm747 = vcmask 883712
        %v748 = vsel %vm747, %v740, %v742
        %v749 = vsel %vm747, %v742, %v744
        %v750 = vsel %vm747, %v744, %v746
        %v752 = vsel %vm219, %v738, 0
        %v755 = vsel %vm223, %v748, 0
        %v758 = vsel %vm223, %v749, 0
        %v761 = vsel %vm223, %v750, 0
        %763 = vmatprep.subr.bf16.mxu0 0
        %764 = vmatpush1.bf16.msra.mxu0 0
        %765 = vmatprep.subr.bf16.mxu0 0
        %766 = vmatpush1.bf16.msra.mxu0 0
        %767 = vmatprep.subr.bf16.mxu0 0
        %768 = vmatpush1.bf16.msra.mxu0 0
        %769 = vmatprep.subr.bf16.mxu0 0
        %770 = vmatpush1.bf16.msra.mxu0 0
        %771 = vmatprep.subr.bf16.mxu0 0
        %772 = vmatpush1.bf16.msra.mxu0 0
        %773 = vmatprep.subr.bf16.mxu0 0
        %774 = vmatpush1.bf16.msra.mxu0 0
        %775 = vmatprep.subr.bf16.mxu0 0
        %776 = vmatpush1.bf16.msra.mxu0 0
        %777 = vmatprep.subr.bf16.mxu0 %v758
        %778 = vmatpush1.bf16.msra.mxu0 %v755
        %779 = vmatprep.subr.bf16.mxu0 0
        %780 = vmatpush2.bf16.msra.mxu0 0
        %781 = vmatprep.subr.bf16.mxu0 0
        %782 = vmatpush2.bf16.msra.mxu0 0
        %783 = vmatprep.subr.bf16.mxu0 0
        %784 = vmatpush2.bf16.msra.mxu0 0
        %785 = vmatprep.subr.bf16.mxu0 0
        %786 = vmatpush2.bf16.msra.mxu0 0
        %787 = vmatprep.subr.bf16.mxu0 0
        %788 = vmatpush2.bf16.msra.mxu0 0
        %789 = vmatprep.subr.bf16.mxu0 0
        %790 = vmatpush2.bf16.msra.mxu0 0
        %791 = vmatprep.subr.bf16.mxu0 0
        %792 = vmatpush2.bf16.msra.mxu0 0
        %793 = vmatprep.subr.bf16.mxu0 0
        %794 = vmatpush2.bf16.msra.mxu0 0
        %795 = vmatprep.mubr.bf16.mxu0 0
        %796 = vmatmul.mubr.bf16.gmra.mxu0 %v752
        %v797 = vpop.f32.mrf.mxu0
        %v798 = vadd.f32 0.0, %v797
        %v799 = vpop.f32.mrf.mxu0
        %v800 = vadd.f32 0.0, %v799
        %v801 = vpop.f32.mrf.mxu0
        %v802 = vpop.f32.mrf.mxu0
        %803 = vdwg.mxu0
        %804 = vmatprep.subr.bf16.mxu0 0
        %805 = vmatpush1.bf16.msra.mxu0 0
        %806 = vmatprep.subr.bf16.mxu0 0
        %807 = vmatpush1.bf16.msra.mxu0 0
        %808 = vmatprep.subr.bf16.mxu0 0
        %809 = vmatpush1.bf16.msra.mxu0 0
        %810 = vmatprep.subr.bf16.mxu0 0
        %811 = vmatpush1.bf16.msra.mxu0 0
        %812 = vmatprep.subr.bf16.mxu0 0
        %813 = vmatpush1.bf16.msra.mxu0 0
        %814 = vmatprep.subr.bf16.mxu0 0
        %815 = vmatpush1.bf16.msra.mxu0 0
        %816 = vmatprep.subr.bf16.mxu0 0
        %817 = vmatpush1.bf16.msra.mxu0 0
        %818 = vmatprep.subr.bf16.mxu0 0
        %819 = vmatpush1.bf16.msra.mxu0 %v761
        %820 = vmatprep.subr.bf16.mxu0 0
        %821 = vmatpush2.bf16.msra.mxu0 0
        %822 = vmatprep.subr.bf16.mxu0 0
        %823 = vmatpush2.bf16.msra.mxu0 0
        %824 = vmatprep.subr.bf16.mxu0 0
        %825 = vmatpush2.bf16.msra.mxu0 0
        %826 = vmatprep.subr.bf16.mxu0 0
        %827 = vmatpush2.bf16.msra.mxu0 0
        %828 = vmatprep.subr.bf16.mxu0 0
        %829 = vmatpush2.bf16.msra.mxu0 0
        %830 = vmatprep.subr.bf16.mxu0 0
        %831 = vmatpush2.bf16.msra.mxu0 0
        %832 = vmatprep.subr.bf16.mxu0 0
        %833 = vmatpush2.bf16.msra.mxu0 0
        %834 = vmatprep.subr.bf16.mxu0 0
        %835 = vmatpush2.bf16.msra.mxu0 0
        %836 = vmatprep.mubr.bf16.mxu0 0
        %837 = vmatmul.mubr.bf16.gmra.mxu0 %v752
        %v838 = vpop.f32.mrf.mxu0
        %v839 = vadd.f32 0.0, %v838
        %v840 = vpop.f32.mrf.mxu0
        %v841 = vpop.f32.mrf.mxu0
        %v842 = vpop.f32.mrf.mxu0
        %843 = vdwg.mxu0
        %v844 = vadd.f32 %v734, %v798
        %v845 = vadd.f32 %v735, %v800
        %v846 = vadd.f32 %v736, %v839
        %s847 = scalar_lea.vmem %s1, 24
        %v848 = vld [vmem:[%s847] sm:$0xf]
        %849 = vrot.lane.b32.xlu0 %v197, 92
        %v850 = vpop.permute.xlu0 %849
        %851 = vrot.lane.b32.xlu0 %v205, 92
        %v852 = vpop.permute.xlu0 %851
        %853 = vrot.lane.b32.xlu0 %v204, 92
        %v854 = vpop.permute.xlu0 %853
        %855 = vrot.lane.b32.xlu0 %v206, 92
        %v856 = vpop.permute.xlu0 %855
        %vm857 = vcmask 752640
        %v858 = vsel %vm857, %v850, %v852
        %v859 = vsel %vm857, %v852, %v854
        %v860 = vsel %vm857, %v854, %v856
        %v862 = vsel %vm219, %v848, 0
        %v865 = vsel %vm223, %v858, 0
        %v868 = vsel %vm223, %v859, 0
        %v871 = vsel %vm223, %v860, 0
        %873 = vmatprep.subr.bf16.mxu0 0
        %874 = vmatpush1.bf16.msra.mxu0 0
        %875 = vmatprep.subr.bf16.mxu0 0
        %876 = vmatpush1.bf16.msra.mxu0 0
        %877 = vmatprep.subr.bf16.mxu0 0
        %878 = vmatpush1.bf16.msra.mxu0 0
        %879 = vmatprep.subr.bf16.mxu0 0
        %880 = vmatpush1.bf16.msra.mxu0 0
        %881 = vmatprep.subr.bf16.mxu0 0
        %882 = vmatpush1.bf16.msra.mxu0 0
        %883 = vmatprep.subr.bf16.mxu0 0
        %884 = vmatpush1.bf16.msra.mxu0 0
        %885 = vmatprep.subr.bf16.mxu0 0
        %886 = vmatpush1.bf16.msra.mxu0 0
        %887 = vmatprep.subr.bf16.mxu0 %v868
        %888 = vmatpush1.bf16.msra.mxu0 %v865
        %889 = vmatprep.subr.bf16.mxu0 0
        %890 = vmatpush2.bf16.msra.mxu0 0
        %891 = vmatprep.subr.bf16.mxu0 0
        %892 = vmatpush2.bf16.msra.mxu0 0
        %893 = vmatprep.subr.bf16.mxu0 0
        %894 = vmatpush2.bf16.msra.mxu0 0
        %895 = vmatprep.subr.bf16.mxu0 0
        %896 = vmatpush2.bf16.msra.mxu0 0
        %897 = vmatprep.subr.bf16.mxu0 0
        %898 = vmatpush2.bf16.msra.mxu0 0
        %899 = vmatprep.subr.bf16.mxu0 0
        %900 = vmatpush2.bf16.msra.mxu0 0
        %901 = vmatprep.subr.bf16.mxu0 0
        %902 = vmatpush2.bf16.msra.mxu0 0
        %903 = vmatprep.subr.bf16.mxu0 0
        %904 = vmatpush2.bf16.msra.mxu0 0
        %905 = vmatprep.mubr.bf16.mxu0 0
        %906 = vmatmul.mubr.bf16.gmra.mxu0 %v862
        %v907 = vpop.f32.mrf.mxu0
        %v908 = vadd.f32 0.0, %v907
        %v909 = vpop.f32.mrf.mxu0
        %v910 = vadd.f32 0.0, %v909
        %v911 = vpop.f32.mrf.mxu0
        %v912 = vpop.f32.mrf.mxu0
        %913 = vdwg.mxu0
        %914 = vmatprep.subr.bf16.mxu0 0
        %915 = vmatpush1.bf16.msra.mxu0 0
        %916 = vmatprep.subr.bf16.mxu0 0
        %917 = vmatpush1.bf16.msra.mxu0 0
        %918 = vmatprep.subr.bf16.mxu0 0
        %919 = vmatpush1.bf16.msra.mxu0 0
        %920 = vmatprep.subr.bf16.mxu0 0
        %921 = vmatpush1.bf16.msra.mxu0 0
        %922 = vmatprep.subr.bf16.mxu0 0
        %923 = vmatpush1.bf16.msra.mxu0 0
        %924 = vmatprep.subr.bf16.mxu0 0
        %925 = vmatpush1.bf16.msra.mxu0 0
        %926 = vmatprep.subr.bf16.mxu0 0
        %927 = vmatpush1.bf16.msra.mxu0 0
        %928 = vmatprep.subr.bf16.mxu0 0
        %929 = vmatpush1.bf16.msra.mxu0 %v871
        %930 = vmatprep.subr.bf16.mxu0 0
        %931 = vmatpush2.bf16.msra.mxu0 0
        %932 = vmatprep.subr.bf16.mxu0 0
        %933 = vmatpush2.bf16.msra.mxu0 0
        %934 = vmatprep.subr.bf16.mxu0 0
        %935 = vmatpush2.bf16.msra.mxu0 0
        %936 = vmatprep.subr.bf16.mxu0 0
        %937 = vmatpush2.bf16.msra.mxu0 0
        %938 = vmatprep.subr.bf16.mxu0 0
        %939 = vmatpush2.bf16.msra.mxu0 0
        %940 = vmatprep.subr.bf16.mxu0 0
        %941 = vmatpush2.bf16.msra.mxu0 0
        %942 = vmatprep.subr.bf16.mxu0 0
        %943 = vmatpush2.bf16.msra.mxu0 0
        %944 = vmatprep.subr.bf16.mxu0 0
        %945 = vmatpush2.bf16.msra.mxu0 0
        %946 = vmatprep.mubr.bf16.mxu0 0
        %947 = vmatmul.mubr.bf16.gmra.mxu0 %v862
        %v948 = vpop.f32.mrf.mxu0
        %v949 = vadd.f32 0.0, %v948
        %v950 = vpop.f32.mrf.mxu0
        %v951 = vpop.f32.mrf.mxu0
        %v952 = vpop.f32.mrf.mxu0
        %953 = vdwg.mxu0
        %v954 = vadd.f32 %v844, %v908
        %v955 = vadd.f32 %v845, %v910
        %v956 = vadd.f32 %v846, %v949
        %s957 = scalar_lea.vmem %s1, 28
        %v958 = vld [vmem:[%s957] sm:$0xf]
        %959 = vrot.lane.b32.xlu0 %v197, 91
        %v960 = vpop.permute.xlu0 %959
        %961 = vrot.lane.b32.xlu0 %v205, 91
        %v962 = vpop.permute.xlu0 %961
        %963 = vrot.lane.b32.xlu0 %v204, 91
        %v964 = vpop.permute.xlu0 %963
        %965 = vrot.lane.b32.xlu0 %v206, 91
        %v966 = vpop.permute.xlu0 %965
        %vm967 = vcmask 744448
        %v968 = vsel %vm967, %v960, %v962
        %v969 = vsel %vm967, %v962, %v964
        %v970 = vsel %vm967, %v964, %v966
        %v972 = vsel %vm219, %v958, 0
        %v975 = vsel %vm223, %v968, 0
        %v978 = vsel %vm223, %v969, 0
        %v981 = vsel %vm223, %v970, 0
        %983 = vmatprep.subr.bf16.mxu0 0
        %984 = vmatpush1.bf16.msra.mxu0 0
        %985 = vmatprep.subr.bf16.mxu0 0
        %986 = vmatpush1.bf16.msra.mxu0 0
        %987 = vmatprep.subr.bf16.mxu0 0
        %988 = vmatpush1.bf16.msra.mxu0 0
        %989 = vmatprep.subr.bf16.mxu0 0
        %990 = vmatpush1.bf16.msra.mxu0 0
        %991 = vmatprep.subr.bf16.mxu0 0
        %992 = vmatpush1.bf16.msra.mxu0 0
        %993 = vmatprep.subr.bf16.mxu0 0
        %994 = vmatpush1.bf16.msra.mxu0 0
        %995 = vmatprep.subr.bf16.mxu0 0
        %996 = vmatpush1.bf16.msra.mxu0 0
        %997 = vmatprep.subr.bf16.mxu0 %v978
        %998 = vmatpush1.bf16.msra.mxu0 %v975
        %999 = vmatprep.subr.bf16.mxu0 0
        %1000 = vmatpush2.bf16.msra.mxu0 0
        %1001 = vmatprep.subr.bf16.mxu0 0
        %1002 = vmatpush2.bf16.msra.mxu0 0
        %1003 = vmatprep.subr.bf16.mxu0 0
        %1004 = vmatpush2.bf16.msra.mxu0 0
        %1005 = vmatprep.subr.bf16.mxu0 0
        %1006 = vmatpush2.bf16.msra.mxu0 0
        %1007 = vmatprep.subr.bf16.mxu0 0
        %1008 = vmatpush2.bf16.msra.mxu0 0
        %1009 = vmatprep.subr.bf16.mxu0 0
        %1010 = vmatpush2.bf16.msra.mxu0 0
        %1011 = vmatprep.subr.bf16.mxu0 0
        %1012 = vmatpush2.bf16.msra.mxu0 0
        %1013 = vmatprep.subr.bf16.mxu0 0
        %1014 = vmatpush2.bf16.msra.mxu0 0
        %1015 = vmatprep.mubr.bf16.mxu0 0
        %1016 = vmatmul.mubr.bf16.gmra.mxu0 %v972
        %v1017 = vpop.f32.mrf.mxu0
        %v1018 = vadd.f32 0.0, %v1017
        %v1019 = vpop.f32.mrf.mxu0
        %v1020 = vadd.f32 0.0, %v1019
        %v1021 = vpop.f32.mrf.mxu0
        %v1022 = vpop.f32.mrf.mxu0
        %1023 = vdwg.mxu0
        %1024 = vmatprep.subr.bf16.mxu0 0
        %1025 = vmatpush1.bf16.msra.mxu0 0
        %1026 = vmatprep.subr.bf16.mxu0 0
        %1027 = vmatpush1.bf16.msra.mxu0 0
        %1028 = vmatprep.subr.bf16.mxu0 0
        %1029 = vmatpush1.bf16.msra.mxu0 0
        %1030 = vmatprep.subr.bf16.mxu0 0
        %1031 = vmatpush1.bf16.msra.mxu0 0
        %1032 = vmatprep.subr.bf16.mxu0 0
        %1033 = vmatpush1.bf16.msra.mxu0 0
        %1034 = vmatprep.subr.bf16.mxu0 0
        %1035 = vmatpush1.bf16.msra.mxu0 0
        %1036 = vmatprep.subr.bf16.mxu0 0
        %1037 = vmatpush1.bf16.msra.mxu0 0
        %1038 = vmatprep.subr.bf16.mxu0 0
        %1039 = vmatpush1.bf16.msra.mxu0 %v981
        %1040 = vmatprep.subr.bf16.mxu0 0
        %1041 = vmatpush2.bf16.msra.mxu0 0
        %1042 = vmatprep.subr.bf16.mxu0 0
        %1043 = vmatpush2.bf16.msra.mxu0 0
        %1044 = vmatprep.subr.bf16.mxu0 0
        %1045 = vmatpush2.bf16.msra.mxu0 0
        %1046 = vmatprep.subr.bf16.mxu0 0
        %1047 = vmatpush2.bf16.msra.mxu0 0
        %1048 = vmatprep.subr.bf16.mxu0 0
        %1049 = vmatpush2.bf16.msra.mxu0 0
        %1050 = vmatprep.subr.bf16.mxu0 0
        %1051 = vmatpush2.bf16.msra.mxu0 0
        %1052 = vmatprep.subr.bf16.mxu0 0
        %1053 = vmatpush2.bf16.msra.mxu0 0
        %1054 = vmatprep.subr.bf16.mxu0 0
        %1055 = vmatpush2.bf16.msra.mxu0 0
        %1056 = vmatprep.mubr.bf16.mxu0 0
        %1057 = vmatmul.mubr.bf16.gmra.mxu0 %v972
        %v1058 = vpop.f32.mrf.mxu0
        %v1059 = vadd.f32 0.0, %v1058
        %v1060 = vpop.f32.mrf.mxu0
        %v1061 = vpop.f32.mrf.mxu0
        %v1062 = vpop.f32.mrf.mxu0
        %1063 = vdwg.mxu0
        %v1064 = vadd.f32 %v954, %v1018
        %v1065 = vadd.f32 %v955, %v1020
        %v1066 = vadd.f32 %v956, %v1059
        %s1067 = scalar_lea.vmem %s1, 32
        %v1068 = vld [vmem:[%s1067] sm:$0xf]
        %1069 = vrot.lane.b32.xlu0 %v197, 90
        %v1070 = vpop.permute.xlu0 %1069
        %1071 = vrot.lane.b32.xlu0 %v205, 90
        %v1072 = vpop.permute.xlu0 %1071
        %1073 = vrot.lane.b32.xlu0 %v204, 90
        %v1074 = vpop.permute.xlu0 %1073
        %1075 = vrot.lane.b32.xlu0 %v206, 90
        %v1076 = vpop.permute.xlu0 %1075
        %vm1077 = vcmask 736256
        %v1078 = vsel %vm1077, %v1070, %v1072
        %v1079 = vsel %vm1077, %v1072, %v1074
        %v1080 = vsel %vm1077, %v1074, %v1076
        %v1082 = vsel %vm219, %v1068, 0
        %v1085 = vsel %vm223, %v1078, 0
        %v1088 = vsel %vm223, %v1079, 0
        %v1091 = vsel %vm223, %v1080, 0
        %1093 = vmatprep.subr.bf16.mxu0 0
        %1094 = vmatpush1.bf16.msra.mxu0 0
        %1095 = vmatprep.subr.bf16.mxu0 0
        %1096 = vmatpush1.bf16.msra.mxu0 0
        %1097 = vmatprep.subr.bf16.mxu0 0
        %1098 = vmatpush1.bf16.msra.mxu0 0
        %1099 = vmatprep.subr.bf16.mxu0 0
        %1100 = vmatpush1.bf16.msra.mxu0 0
        %1101 = vmatprep.subr.bf16.mxu0 0
        %1102 = vmatpush1.bf16.msra.mxu0 0
        %1103 = vmatprep.subr.bf16.mxu0 0
        %1104 = vmatpush1.bf16.msra.mxu0 0
        %1105 = vmatprep.subr.bf16.mxu0 0
        %1106 = vmatpush1.bf16.msra.mxu0 0
        %1107 = vmatprep.subr.bf16.mxu0 %v1088
        %1108 = vmatpush1.bf16.msra.mxu0 %v1085
        %1109 = vmatprep.subr.bf16.mxu0 0
        %1110 = vmatpush2.bf16.msra.mxu0 0
        %1111 = vmatprep.subr.bf16.mxu0 0
        %1112 = vmatpush2.bf16.msra.mxu0 0
        %1113 = vmatprep.subr.bf16.mxu0 0
        %1114 = vmatpush2.bf16.msra.mxu0 0
        %1115 = vmatprep.subr.bf16.mxu0 0
        %1116 = vmatpush2.bf16.msra.mxu0 0
        %1117 = vmatprep.subr.bf16.mxu0 0
        %1118 = vmatpush2.bf16.msra.mxu0 0
        %1119 = vmatprep.subr.bf16.mxu0 0
        %1120 = vmatpush2.bf16.msra.mxu0 0
        %1121 = vmatprep.subr.bf16.mxu0 0
        %1122 = vmatpush2.bf16.msra.mxu0 0
        %1123 = vmatprep.subr.bf16.mxu0 0
        %1124 = vmatpush2.bf16.msra.mxu0 0
        %1125 = vmatprep.mubr.bf16.mxu0 0
        %1126 = vmatmul.mubr.bf16.gmra.mxu0 %v1082
        %v1127 = vpop.f32.mrf.mxu0
        %v1128 = vadd.f32 0.0, %v1127
        %v1129 = vpop.f32.mrf.mxu0
        %v1130 = vadd.f32 0.0, %v1129
        %v1131 = vpop.f32.mrf.mxu0
        %v1132 = vpop.f32.mrf.mxu0
        %1133 = vdwg.mxu0
        %1134 = vmatprep.subr.bf16.mxu0 0
        %1135 = vmatpush1.bf16.msra.mxu0 0
        %1136 = vmatprep.subr.bf16.mxu0 0
        %1137 = vmatpush1.bf16.msra.mxu0 0
        %1138 = vmatprep.subr.bf16.mxu0 0
        %1139 = vmatpush1.bf16.msra.mxu0 0
        %1140 = vmatprep.subr.bf16.mxu0 0
        %1141 = vmatpush1.bf16.msra.mxu0 0
        %1142 = vmatprep.subr.bf16.mxu0 0
        %1143 = vmatpush1.bf16.msra.mxu0 0
        %1144 = vmatprep.subr.bf16.mxu0 0
        %1145 = vmatpush1.bf16.msra.mxu0 0
        %1146 = vmatprep.subr.bf16.mxu0 0
        %1147 = vmatpush1.bf16.msra.mxu0 0
        %1148 = vmatprep.subr.bf16.mxu0 0
        %1149 = vmatpush1.bf16.msra.mxu0 %v1091
        %1150 = vmatprep.subr.bf16.mxu0 0
        %1151 = vmatpush2.bf16.msra.mxu0 0
        %1152 = vmatprep.subr.bf16.mxu0 0
        %1153 = vmatpush2.bf16.msra.mxu0 0
        %1154 = vmatprep.subr.bf16.mxu0 0
        %1155 = vmatpush2.bf16.msra.mxu0 0
        %1156 = vmatprep.subr.bf16.mxu0 0
        %1157 = vmatpush2.bf16.msra.mxu0 0
        %1158 = vmatprep.subr.bf16.mxu0 0
        %1159 = vmatpush2.bf16.msra.mxu0 0
        %1160 = vmatprep.subr.bf16.mxu0 0
        %1161 = vmatpush2.bf16.msra.mxu0 0
        %1162 = vmatprep.subr.bf16.mxu0 0
        %1163 = vmatpush2.bf16.msra.mxu0 0
        %1164 = vmatprep.subr.bf16.mxu0 0
        %1165 = vmatpush2.bf16.msra.mxu0 0
        %1166 = vmatprep.mubr.bf16.mxu0 0
        %1167 = vmatmul.mubr.bf16.gmra.mxu0 %v1082
        %v1168 = vpop.f32.mrf.mxu0
        %v1169 = vadd.f32 0.0, %v1168
        %v1170 = vpop.f32.mrf.mxu0
        %v1171 = vpop.f32.mrf.mxu0
        %v1172 = vpop.f32.mrf.mxu0
        %1173 = vdwg.mxu0
        %v1174 = vadd.f32 %v1064, %v1128
        %v1175 = vadd.f32 %v1065, %v1130
        %v1176 = vadd.f32 %v1066, %v1169
        %v1177 = vld [vmem:[%s2] sm:$0xff]
        %s1178 = scalar_lea.vmem %s2, 8
        %v1179 = vld [vmem:[%s1178] sm:$0xff]
        %s1180 = scalar_lea.vmem %s2, 16
        %v1181 = vld [vmem:[%s1180] sm:$0xff]
        %1183 = vset.pattern.permute.xlu0 0
        %1184 = vperm.xlu0 %1183, %v1177
        %v1185 = vpop.permute.xlu0 %1184
        %v1187 = vadd.f32 %v1174, %v1185
        %v1188 = vadd.f32 %v1175, %v1185
        %v1189 = vadd.f32 %v1176, %v1185
        %v1190 = vrot.slane %v1187, 4
        %v1191 = vadd.f32 %v1187, %v1190
        %v1192 = vrot.slane %v1191, 2
        %v1193 = vadd.f32 %v1191, %v1192
        %v1194 = vrot.slane %v1193, 1
        %v1195 = vadd.f32 %v1193, %v1194
        %v1196 = vrot.slane %v1188, 4
        %v1197 = vadd.f32 %v1188, %v1196
        %v1198 = vrot.slane %v1197, 2
        %v1199 = vadd.f32 %v1197, %v1198
        %v1200 = vrot.slane %v1199, 1
        %v1201 = vadd.f32 %v1199, %v1200
        %v1202 = vrot.slane %v1189, 4
        %v1203 = vadd.f32 %v1189, %v1202
        %v1204 = vrot.slane %v1203, 2
        %v1205 = vadd.f32 %v1203, %v1204
        %v1206 = vrot.slane %v1205, 1
        %v1207 = vadd.f32 %v1205, %v1206
        %v1208 = vrcp.pop 8.0
        %v1209 = vmul.f32 %v1195, %v1208
        %v1210 = vmul.f32 %v1201, %v1208
        %v1211 = vmul.f32 %v1207, %v1208
        %v1212 = vsub.f32 %v1187, %v1209
        %v1213 = vsub.f32 %v1188, %v1210
        %v1214 = vsub.f32 %v1189, %v1211
        %v1215 = vmul.f32 %v1212, %v1212
        %v1216 = vmul.f32 %v1213, %v1213
        %v1217 = vmul.f32 %v1214, %v1214
        %v1218 = vrot.slane %v1215, 4
        %v1219 = vadd.f32 %v1215, %v1218
        %v1220 = vrot.slane %v1219, 2
        %v1221 = vadd.f32 %v1219, %v1220
        %v1222 = vrot.slane %v1221, 1
        %v1223 = vadd.f32 %v1221, %v1222
        %v1224 = vrot.slane %v1216, 4
        %v1225 = vadd.f32 %v1216, %v1224
        %v1226 = vrot.slane %v1225, 2
        %v1227 = vadd.f32 %v1225, %v1226
        %v1228 = vrot.slane %v1227, 1
        %v1229 = vadd.f32 %v1227, %v1228
        %v1230 = vrot.slane %v1217, 4
        %v1231 = vadd.f32 %v1217, %v1230
        %v1232 = vrot.slane %v1231, 2
        %v1233 = vadd.f32 %v1231, %v1232
        %v1234 = vrot.slane %v1233, 1
        %v1235 = vadd.f32 %v1233, %v1234
        %v1236 = vmul.f32 %v1223, %v1208
        %v1237 = vmul.f32 %v1229, %v1208
        %v1238 = vmul.f32 %v1235, %v1208
        %v1239 = vadd.f32 %v1236, 1e-05
        %v1240 = vadd.f32 %v1237, 1e-05
        %v1241 = vadd.f32 %v1238, 1e-05
        %v1242 = vrsqrt.pop %v1239
        %v1243 = vrsqrt.pop %v1240
        %v1244 = vrsqrt.pop %v1241
        %v1245 = vmul.f32 %v1212, %v1242
        %v1246 = vmul.f32 %v1213, %v1243
        %v1247 = vmul.f32 %v1214, %v1244
        %1249 = vset.pattern.permute.xlu0 0
        %1250 = vperm.xlu0 %1249, %v1179
        %v1251 = vpop.permute.xlu0 %1250
        %v1253 = vmul.f32 %v1245, %v1251
        %v1254 = vmul.f32 %v1246, %v1251
        %v1255 = vmul.f32 %v1247, %v1251
        %1257 = vset.pattern.permute.xlu0 0
        %1258 = vperm.xlu0 %1257, %v1181
        %v1259 = vpop.permute.xlu0 %1258
        %v1261 = vadd.f32 %v1253, %v1259
        %v1262 = vadd.f32 %v1254, %v1259
        %v1263 = vadd.f32 %v1255, %v1259
        %v1264 = vmul.f32 %v1261, 0.01
        %v1265 = vmul.f32 %v1262, 0.01
        %v1266 = vmul.f32 %v1263, 0.01
        %v1267 = vmax.f32 %v1261, %v1264
        %v1268 = vmax.f32 %v1262, %v1265
        %v1269 = vmax.f32 %v1263, %v1266
        %1270 = vst [vmem:[%s177] sm:$0xff] %v1267
        %1271 = vst [vmem:[%s177 + $0x8] sm:$0xff] %v1268
        %1272 = vst [vmem:[%s177 + $0x10] sm:$0xff] %v1269
        %s1273 = sand.u32 %s107, 1
        %s1274 = scalar_lea.sflag [#allocation3], %s1273
        %s1275 = sand.u32 %s107, 1
        %s1276 = smul.addr %s1275, 24
        %s1277 = scalar_lea.vmem [#allocation2], %s1276
        // Predicated region
        $region33: #{tpu_custom_call.1} parent=31 // pred_check
          %p1278 = pneg %p117
        $region34: #{tpu_custom_call.1} parent=31 // pred_check_branch
          %1280 = sbr.rel (%p1278) target = $region36
        $region35: #{tpu_custom_call.1} parent=31 // pred_region
          %s1281 = smul.u32 3, %s22
          %s1283 = ssub.s32 384, 384
          %1284 = vsyncadd %s1274, %s1283
          %s1285 = smul.addr %s21, 3
          %s1286 = sadd.s32 %s1281, %s1285
          %s1287 = smul.addr %s1286, 128
          %s1288 = scalar_lea.hbm %s3, %s1287
          %s1290 = sshll.u32 %s1277, 4
          %s1291 = int_to_ptr.vmem [resolvable:$true] %s1290
          %1293 = dma.vmem_to_hbm [thread:$0]  %s1291, 384, %s1288, %s1274
        $region36: #{tpu_custom_call.1} parent=31 // pred_fallthru
          _
      $region32: #{tpu_custom_call.1} parent=5 // pred_fallthru
        _
      %p1294 = scmp.le.s32.totalorder 2, %s12
      // Predicated region
      $region37: #{tpu_custom_call.1} parent=5 // pred_check
        %p1295 = pneg %p1294
      $region38: #{tpu_custom_call.1} parent=5 // pred_check_branch
        %1297 = sbr.rel (%p1295) target = $region40
      $region39: #{tpu_custom_call.1} parent=5 // pred_region
        %s1298 = ssub.s32 %s12, 2
        // Predicated region
        $region41: #{tpu_custom_call.1} parent=39 // pred_check
          %p1299 = pneg %p123
        $region42: #{tpu_custom_call.1} parent=39 // pred_check_branch
          %1301 = sbr.rel (%p1299) target = $region44
        $region43: #{tpu_custom_call.1} parent=39 // pred_region
          %s1302 = sand.u32 %s108, 1
          %s1303 = scalar_lea.sflag [#allocation3], %s1302
          %s1304 = sand.u32 %s108, 1
          %s1305 = smul.addr %s1304, 24
          %s1306 = scalar_lea.vmem [#allocation2], %s1305
          %1307 = dma.done %s1303, 384
        $region44: #{tpu_custom_call.1} parent=39 // pred_fallthru
          _
      $region40: #{tpu_custom_call.1} parent=5 // pred_fallthru
        _
    $region6: #{tpu_custom_call.1} parent=1 // loop_footer
      %s16 = sadd.s32 1, %s12
    $region7: #{tpu_custom_call.1} parent=1 // loop_footer_branch
      %11 = sbr.rel target = $region3
    $region8: #{tpu_custom_call.1} parent=1 // loop_exit
      _
    %1308 = vsyncpa [#allocation3], 1
    %s1309 = scalar_lea.sflag [#allocation3], 1
    %1310 = vsyncpa %s1309, 1

</llo_original>
